<compile_context>
chip_gen: v7x
topology: tpu7x:2x2x1
jax: 0.10.0
libtpu: 0.0.40
codegen_flags: <defaults>
</compile_context>

<pallas_src>
import functools

import jax
import jax.numpy as jnp
import numpy as np
from jax.experimental import pallas as pl
from jax.experimental.pallas import tpu as pltpu

SSIM_LOSS_WEIGHT = 0.85
C1 = 0.0001
C2 = 0.0009
CLIP_LOSS = 0.5

_LANE = 128      # lane tile (last dim)
_SUBLANE = 8     # sublane tile (second-to-last dim)


def _round_up(x, m):
    return (x + m - 1) // m * m


def _choose_tile_h(Hp, Wp, C, B, budget_bytes=28 * 2 ** 20):
    """Pick an H tile (multiple of 8, divides Hp) so the per-step VMEM stays bounded."""
    # Rough per-row VMEM bytes: 2 inputs x 2 pipeline buffers x C planes, the
    # double-buffered photo output block, and ~14 live f32 temporary planes in the body.
    row_bytes = 4 * Wp * (2 * 2 * C + 2 + 14)
    target = max(_SUBLANE, min(Hp, budget_bytes // max(row_bytes, 1)))
    th = _SUBLANE
    d = _SUBLANE
    while d <= target:
        if Hp % d == 0:
            th = d
        d += _SUBLANE
    # v7x has two TensorCores; make sure there are >= 2 "parallel" grid steps.
    if B * (Hp // th) < 2:
        best = None
        d = _SUBLANE
        while d <= Hp // 2:
            if Hp % d == 0:
                best = d
            d += _SUBLANE
        if best is not None:
            th = best
    return th


def _photometric_kernel(syn_ref, real_ref, hsyn_ref, hreal_ref, photo_ref, stats_ref,
                        *, H, W, TH, need_row_mask, need_col_mask):
    """One (batch, H-tile) block per grid step.

    syn_ref, real_ref   : (C, TH, Wp)   input tiles (alignment-padded on the right/bottom)
    hsyn_ref, hreal_ref : (C, 2, Wp)    reflection-aware halo rows (row 0 = above tile,
                                        row 1 = below tile), built in the wrapper
    photo_ref           : (TH, Wp)      photometric loss map tile (pre-clip)
    stats_ref           : (1, 128)      lane 0 = sum(photo[valid]), lane 1 = sum(photo^2)
    """
    C = syn_ref.shape[0]
    Wp = syn_ref.shape[2]

    # Masks shared by every pool / channel (hoisted: computed once).
    row = jax.lax.broadcasted_iota(jnp.int32, (TH, Wp), 0)
    col = jax.lax.broadcasted_iota(jnp.int32, (TH, Wp), 1)
    row_first = row == 0
    row_last = row == TH - 1
    col_first = col == 0
    col_last = col == (W - 1)

    def pool9(q, q_above, q_below):
        """Unscaled (x9) 3x3 box sum with reflection borders (separable, XLU rolls).

        Vertical first: wrapped rolls within the tile, with the halo rows spliced into
        the first/last tile row via a single select per tap (row reflection at the true
        image border is already baked into the halo rows / alignment pad).
        Horizontal second: wrapped lane rolls, with the column reflection at col 0 and
        col W-1 handled by one select per tap (cheaper than the sign-mask fixup).
        If a bundle dump shows the XLU (vector-extended) slot saturating, the vertical
        rolls can be swapped for +/-1-row loads from a VMEM scratch copy.
        """
        qm = pltpu.roll(q, 1, 0)           # q[i-1]   (wraps within tile)
        qp = pltpu.roll(q, TH - 1, 0)      # q[i+1]   (wraps within tile)
        up = jnp.where(row_first, q_above, qm)
        dn = jnp.where(row_last, q_below, qp)
        v = up + q + dn
        vm = pltpu.roll(v, 1, 1)           # v[:, j-1] (wraps)
        vp = pltpu.roll(v, Wp - 1, 1)      # v[:, j+1] (wraps)
        left = jnp.where(col_first, vp, vm)    # reflect: left of col 0 is col 1
        right = jnp.where(col_last, vm, vp)    # reflect: right of col W-1 is col W-2
        return left + v + right

    ssim_acc = jnp.zeros((TH, Wp), jnp.float32)
    l1_acc = jnp.zeros((TH, Wp), jnp.float32)
    for c in range(C):  # static unroll; temporaries are tile-sized so live VMEM stays small
        x = syn_ref[c].astype(jnp.float32)     # (TH, Wp)
        y = real_ref[c].astype(jnp.float32)
        hx = hsyn_ref[c].astype(jnp.float32)   # (2, Wp)
        hy = hreal_ref[c].astype(jnp.float32)
        hx_a, hx_b = hx[0:1, :], hx[1:2, :]
        hy_a, hy_b = hy[0:1, :], hy[1:2, :]

        sx = pool9(x, hx_a, hx_b)
        sy = pool9(y, hy_a, hy_b)
        sxy = pool9(x * y, hx_a * hy_a, hx_b * hy_b)
        sxx = pool9(x * x, hx_a * hx_a, hx_b * hx_b)
        syy = pool9(y * y, hy_a * hy_a, hy_b * hy_b)

        # SSIM on unscaled box sums: the 1/9 pool scale cancels between numerator and
        # denominator (C1 -> 81*C1, C2 -> 81*C2), removing one full-plane mul per pool.
        sx2 = sx * sx
        sy2 = sy * sy
        sxsy = sx * sy
        cov9 = 9.0 * sxy - sxsy            # 81 * sigma_xy
        varx9 = 9.0 * sxx - sx2            # 81 * sigma_x
        vary9 = 9.0 * syy - sy2            # 81 * sigma_y
        num = (2.0 * sxsy + 81.0 * C1) * (2.0 * cov9 + 81.0 * C2)
        den = (sx2 + sy2 + 81.0 * C1) * (varx9 + vary9 + 81.0 * C2)
        ssim = num * pl.reciprocal(den, approx=False)   # reciprocal rides the EUP slot
        ssim_acc = ssim_acc + jnp.clip((1.0 - ssim) * 0.5, 0.0, 1.0)
        l1_acc = l1_acc + jnp.abs(x - y)

    photo = ((SSIM_LOSS_WEIGHT / C) * ssim_acc
             + ((1.0 - SSIM_LOSS_WEIGHT) / C) * l1_acc)          # (TH, Wp)
    photo_ref[...] = photo.astype(photo_ref.dtype)

    # Per-(batch, tile) partial sums for the global clip threshold (mean + 0.5*std).
    # The valid-mask is only emitted when alignment padding actually exists.
    pv = photo
    if need_row_mask or need_col_mask:
        valid = None
        if need_row_mask:
            valid = (pl.program_id(1) * TH + row) < H
        if need_col_mask:
            cmask = col < W
            valid = cmask if valid is None else jnp.logical_and(valid, cmask)
        pv = jnp.where(valid, photo, 0.0)
    s = jnp.sum(pv)
    s2 = jnp.sum(pv * pv)
    lane = jax.lax.broadcasted_iota(jnp.int32, (1, _LANE), 1)
    stats_ref[...] = jnp.where(lane == 0, s,
                               jnp.where(lane == 1, s2, 0.0)).astype(jnp.float32)


def _pad_and_halos(x, H, W, Hp, Wp, TH):
    """x: (B, C, H, W) -> aligned (B, C, Hp, Wp) plus reflection-aware halos (B, T, C, 2, Wp).

    If Hp > H the first alignment-pad row is set to row H-2 (the reflection), so the
    in-kernel vertical pool needs no bottom-of-image fixup regardless of where row H-1
    lands inside a tile.
    """
    B, C = x.shape[0], x.shape[1]
    T = Hp // TH
    parts = [x]
    if Hp > H:
        parts.append(x[:, :, H - 2:H - 1, :])                       # reflected row H
        if Hp - H - 1 > 0:
            parts.append(jnp.zeros((B, C, Hp - H - 1, W), x.dtype))
    xa = jnp.concatenate(parts, axis=2) if len(parts) > 1 else x
    if Wp > W:
        xa = jnp.pad(xa, ((0, 0), (0, 0), (0, 0), (0, Wp - W)))

    # Halo row indices (all refer to valid image rows; reflection applied at the borders).
    idx = []
    for t in range(T):
        idx.append(1 if t == 0 else t * TH - 1)                           # above tile t
        idx.append((t + 1) * TH if (t + 1) * TH <= H - 1 else H - 2)      # below tile t
    halo = jnp.take(xa, jnp.asarray(idx, dtype=jnp.int32), axis=2)        # (B, C, 2T, Wp)
    halo = halo.reshape(B, C, T, 2, Wp).transpose(0, 2, 1, 3, 4)          # (B, T, C, 2, Wp)
    return xa, halo


@jax.jit
def photometric_loss(real_image, synthesised_image):
    """real_image, synthesised_image: [B, C, H, W] -> [B, 1, H, W] float32."""
    assert real_image.shape == synthesised_image.shape
    B, C, H, W = real_image.shape
    assert H >= 2 and W >= 2, "reflection padding needs H >= 2 and W >= 2"

    Hp = _round_up(max(H, _SUBLANE), _SUBLANE)
    Wp = _round_up(max(W, _LANE), _LANE)
    TH = _choose_tile_h(Hp, Wp, C, B)
    T = Hp // TH

    syn_al, syn_halo = _pad_and_halos(synthesised_image, H, W, Hp, Wp, TH)
    real_al, real_halo = _pad_and_halos(real_image, H, W, Hp, Wp, TH)

    kernel = functools.partial(_photometric_kernel, H=H, W=W, TH=TH,
                               need_row_mask=(Hp != H), need_col_mask=(Wp != W))

    # Explicit scoped-VMEM limit sized from the real per-step footprint (+ headroom).
    est = 4 * Wp * TH * (2 * 2 * C + 2 + 14)
    vmem_limit = int(min(64 * 2 ** 20, max(32 * 2 ** 20, 2 * est)))

    photo_pad, stats = pl.pallas_call(
        kernel,
        out_shape=(
            jax.ShapeDtypeStruct((B, 1, Hp, Wp), jnp.float32),
            jax.ShapeDtypeStruct((B, T, 1, _LANE), jnp.float32),
        ),
        grid_spec=pltpu.PrefetchScalarGridSpec(
            num_scalar_prefetch=0,
            grid=(B, T),
            in_specs=[
                pl.BlockSpec((None, C, TH, Wp), lambda b, t: (b, 0, t, 0)),
                pl.BlockSpec((None, C, TH, Wp), lambda b, t: (b, 0, t, 0)),
                pl.BlockSpec((None, None, C, 2, Wp), lambda b, t: (b, t, 0, 0, 0)),
                pl.BlockSpec((None, None, C, 2, Wp), lambda b, t: (b, t, 0, 0, 0)),
            ],
            out_specs=(
                pl.BlockSpec((None, None, TH, Wp), lambda b, t: (b, 0, t, 0)),
                pl.BlockSpec((None, None, 1, _LANE), lambda b, t: (b, t, 0, 0)),
            ),
        ),
        compiler_params=pltpu.CompilerParams(
            dimension_semantics=("parallel", "parallel"),
            vmem_limit_bytes=vmem_limit,
        ),
    )(syn_al, real_al, syn_halo, real_halo)

    # Global clip threshold: mean + 0.5 * std (unbiased, ddof=1) from per-tile partials.
    # Per-tile partial sums keep the f32 accumulation short; the combination here is a
    # small pairwise sum over B*T values.
    n = B * H * W
    total = jnp.sum(stats[:, :, 0, 0])
    total_sq = jnp.sum(stats[:, :, 0, 1])
    mean = total / n
    var = jnp.maximum(total_sq - n * mean * mean, 0.0) / max(n - 1, 1)
    thresh = mean + CLIP_LOSS * jnp.sqrt(var)

    photo = photo_pad if (Hp, Wp) == (H, W) else photo_pad[:, :, :H, :W]
    return jnp.minimum(photo, thresh)   # slice + clamp fuse under jit


def _reference(real, syn):
    """Pure-JAX reference mirroring the PyTorch forward (independent correctness check)."""
    pad = 1
    xp = jnp.pad(syn.astype(jnp.float32), ((0, 0), (0, 0), (pad, pad), (pad, pad)), mode="reflect")
    yp = jnp.pad(real.astype(jnp.float32), ((0, 0), (0, 0), (pad, pad), (pad, pad)), mode="reflect")

    def pool(a):
        B, C, Hp2, Wp2 = a.shape
        H, W = Hp2 - 2 * pad, Wp2 - 2 * pad
        acc = jnp.zeros((B, C, H, W), jnp.float32)
        for di in range(3):
            for dj in range(3):
                acc = acc + a[:, :, di:di + H, dj:dj + W]
        return acc / 9.0

    mu_x, mu_y = pool(xp), pool(yp)
    x_mu2, y_mu2, xy_mu = mu_x ** 2, mu_y ** 2, mu_x * mu_y
    sigma_x = pool(xp * xp) - x_mu2
    sigma_y = pool(yp * yp) - y_mu2
    sigma_xy = pool(xp * yp) - xy_mu
    ssim = ((2 * xy_mu + C1) * (2 * sigma_xy + C2)) / ((x_mu2 + y_mu2 + C1) * (sigma_x + sigma_y + C2))
    ssim_loss = jnp.clip((1.0 - ssim) / 2.0, 0.0, 1.0)
    l1 = jnp.abs(syn - real)
    photo = (SSIM_LOSS_WEIGHT * ssim_loss.mean(axis=1, keepdims=True)
             + (1.0 - SSIM_LOSS_WEIGHT) * l1.mean(axis=1, keepdims=True))
    thr = jnp.mean(photo) + CLIP_LOSS * jnp.std(photo, ddof=1)
    return jnp.minimum(photo, thr)


if __name__ == "__main__":
    key = jax.random.PRNGKey(0)
    k1, k2 = jax.random.split(key)
    B, C, H, W = 2, 3, 16, 16
    real = jax.random.uniform(k1, (B, C, H, W), dtype=jnp.float32)
    syn = jax.random.uniform(k2, (B, C, H, W), dtype=jnp.float32)

    out = jax.block_until_ready(photometric_loss(real, syn))
    assert out.shape == (B, 1, H, W)

    ref = jax.block_until_ready(_reference(real, syn))
    err = float(np.max(np.abs(np.asarray(out) - np.asarray(ref))))
    assert np.allclose(np.asarray(out), np.asarray(ref), rtol=1e-5, atol=2e-5), err
    print("KERNEL_OK")
</pallas_src>

<mosaic_0001>
module attributes {stable_mosaic.version = 11 : i64} {
  func.func @_photometric_kernel(%arg0: i32, %arg1: i32, %arg2: memref<1x3x16x128xf32, #tpu.memory_space<vmem>>, %arg3: memref<1x3x16x128xf32, #tpu.memory_space<vmem>>, %arg4: memref<1x1x3x2x128xf32, #tpu.memory_space<vmem>>, %arg5: memref<1x1x3x2x128xf32, #tpu.memory_space<vmem>>, %arg6: memref<1x1x16x128xf32, #tpu.memory_space<vmem>>, %arg7: memref<1x1x1x128xf32, #tpu.memory_space<vmem>>) attributes {dimension_semantics = [#tpu.dimension_semantics<parallel>, #tpu.dimension_semantics<parallel>], iteration_bounds = array<i64: 2, 1>, scalar_prefetch = 0 : i64, scratch_operands = 0 : i64, tpu.core_type = #tpu.core_type<tc>, window_params = [{transform_indices = @transform_0, window_bounds = array<i64: 1, 3, 16, 128>}, {transform_indices = @transform_1, window_bounds = array<i64: 1, 3, 16, 128>}, {transform_indices = @transform_2, window_bounds = array<i64: 1, 1, 3, 2, 128>}, {transform_indices = @transform_3, window_bounds = array<i64: 1, 1, 3, 2, 128>}, {transform_indices = @transform_4, window_bounds = array<i64: 1, 1, 16, 128>}, {transform_indices = @transform_5, window_bounds = array<i64: 1, 1, 1, 128>}]} {
    %0 = tpu.iota {dimensions = array<i32: 0>} : vector<16x128xi32>
    %1 = tpu.iota {dimensions = array<i32: 1>} : vector<16x128xi32>
    %c0_i32 = arith.constant 0 : i32
    %2 = vector.broadcast %c0_i32 : i32 to vector<16x128xi32>
    %3 = arith.cmpi eq, %0, %2 : vector<16x128xi32>
    %c15_i32 = arith.constant 15 : i32
    %4 = vector.broadcast %c15_i32 : i32 to vector<16x128xi32>
    %5 = arith.cmpi eq, %0, %4 : vector<16x128xi32>
    %c0_i32_0 = arith.constant 0 : i32
    %6 = vector.broadcast %c0_i32_0 : i32 to vector<16x128xi32>
    %7 = arith.cmpi eq, %1, %6 : vector<16x128xi32>
    %c15_i32_1 = arith.constant 15 : i32
    %8 = vector.broadcast %c15_i32_1 : i32 to vector<16x128xi32>
    %9 = arith.cmpi eq, %1, %8 : vector<16x128xi32>
    %cst = arith.constant 0.000000e+00 : f32
    %10 = vector.broadcast %cst : f32 to vector<16x128xf32>
    %cst_2 = arith.constant 0.000000e+00 : f32
    %11 = vector.broadcast %cst_2 : f32 to vector<16x128xf32>
    %c0 = arith.constant 0 : index
    %c0_3 = arith.constant 0 : index
    %c0_4 = arith.constant 0 : index
    %c0_5 = arith.constant 0 : index
    %12 = vector.load %arg2[%c0, %c0_3, %c0_4, %c0_5] : memref<1x3x16x128xf32, #tpu.memory_space<vmem>>, vector<1x1x16x128xf32>
    %13 = vector.shape_cast %12 : vector<1x1x16x128xf32> to vector<16x128xf32>
    %c0_6 = arith.constant 0 : index
    %c0_7 = arith.constant 0 : index
    %c0_8 = arith.constant 0 : index
    %c0_9 = arith.constant 0 : index
    %14 = vector.load %arg3[%c0_6, %c0_7, %c0_8, %c0_9] : memref<1x3x16x128xf32, #tpu.memory_space<vmem>>, vector<1x1x16x128xf32>
    %15 = vector.shape_cast %14 : vector<1x1x16x128xf32> to vector<16x128xf32>
    %c0_10 = arith.constant 0 : index
    %c0_11 = arith.constant 0 : index
    %c0_12 = arith.constant 0 : index
    %c0_13 = arith.constant 0 : index
    %c0_14 = arith.constant 0 : index
    %16 = vector.load %arg4[%c0_10, %c0_11, %c0_12, %c0_13, %c0_14] : memref<1x1x3x2x128xf32, #tpu.memory_space<vmem>>, vector<1x1x1x2x128xf32>
    %17 = vector.shape_cast %16 : vector<1x1x1x2x128xf32> to vector<2x128xf32>
    %c0_15 = arith.constant 0 : index
    %c0_16 = arith.constant 0 : index
    %c0_17 = arith.constant 0 : index
    %c0_18 = arith.constant 0 : index
    %c0_19 = arith.constant 0 : index
    %18 = vector.load %arg5[%c0_15, %c0_16, %c0_17, %c0_18, %c0_19] : memref<1x1x3x2x128xf32, #tpu.memory_space<vmem>>, vector<1x1x1x2x128xf32>
    %19 = vector.shape_cast %18 : vector<1x1x1x2x128xf32> to vector<2x128xf32>
    %20 = vector.extract_strided_slice %17 {offsets = [0, 0], sizes = [1, 128], strides = [1, 1]} : vector<2x128xf32> to vector<1x128xf32>
    %21 = vector.extract_strided_slice %17 {offsets = [1, 0], sizes = [1, 128], strides = [1, 1]} : vector<2x128xf32> to vector<1x128xf32>
    %22 = vector.extract_strided_slice %19 {offsets = [0, 0], sizes = [1, 128], strides = [1, 1]} : vector<2x128xf32> to vector<1x128xf32>
    %23 = vector.extract_strided_slice %19 {offsets = [1, 0], sizes = [1, 128], strides = [1, 1]} : vector<2x128xf32> to vector<1x128xf32>
    %c1_i32 = arith.constant 1 : i32
    %24 = tpu.dynamic_rotate %13 by %c1_i32 dim 0 : vector<16x128xf32>, i32 -> vector<16x128xf32>
    %c15_i32_20 = arith.constant 15 : i32
    %25 = tpu.dynamic_rotate %13 by %c15_i32_20 dim 0 : vector<16x128xf32>, i32 -> vector<16x128xf32>
    %26 = vector.shape_cast %20 : vector<1x128xf32> to vector<1x128xf32>
    %27 = vector.broadcast %26 : vector<1x128xf32> to vector<16x128xf32>
    %28 = arith.select %3, %27, %24 : vector<16x128xi1>, vector<16x128xf32>
    %29 = vector.shape_cast %21 : vector<1x128xf32> to vector<1x128xf32>
    %30 = vector.broadcast %29 : vector<1x128xf32> to vector<16x128xf32>
    %31 = arith.select %5, %30, %25 : vector<16x128xi1>, vector<16x128xf32>
    %32 = arith.addf %28, %13 : vector<16x128xf32>
    %33 = arith.addf %32, %31 : vector<16x128xf32>
    %c1_i32_21 = arith.constant 1 : i32
    %34 = tpu.dynamic_rotate %33 by %c1_i32_21 dim 1 : vector<16x128xf32>, i32 -> vector<16x128xf32>
    %c127_i32 = arith.constant 127 : i32
    %35 = tpu.dynamic_rotate %33 by %c127_i32 dim 1 : vector<16x128xf32>, i32 -> vector<16x128xf32>
    %36 = arith.select %7, %35, %34 : vector<16x128xi1>, vector<16x128xf32>
    %37 = arith.select %9, %34, %35 : vector<16x128xi1>, vector<16x128xf32>
    %38 = arith.addf %36, %33 : vector<16x128xf32>
    %39 = arith.addf %38, %37 : vector<16x128xf32>
    %c1_i32_22 = arith.constant 1 : i32
    %40 = tpu.dynamic_rotate %15 by %c1_i32_22 dim 0 : vector<16x128xf32>, i32 -> vector<16x128xf32>
    %c15_i32_23 = arith.constant 15 : i32
    %41 = tpu.dynamic_rotate %15 by %c15_i32_23 dim 0 : vector<16x128xf32>, i32 -> vector<16x128xf32>
    %42 = vector.shape_cast %22 : vector<1x128xf32> to vector<1x128xf32>
    %43 = vector.broadcast %42 : vector<1x128xf32> to vector<16x128xf32>
    %44 = arith.select %3, %43, %40 : vector<16x128xi1>, vector<16x128xf32>
    %45 = vector.shape_cast %23 : vector<1x128xf32> to vector<1x128xf32>
    %46 = vector.broadcast %45 : vector<1x128xf32> to vector<16x128xf32>
    %47 = arith.select %5, %46, %41 : vector<16x128xi1>, vector<16x128xf32>
    %48 = arith.addf %44, %15 : vector<16x128xf32>
    %49 = arith.addf %48, %47 : vector<16x128xf32>
    %c1_i32_24 = arith.constant 1 : i32
    %50 = tpu.dynamic_rotate %49 by %c1_i32_24 dim 1 : vector<16x128xf32>, i32 -> vector<16x128xf32>
    %c127_i32_25 = arith.constant 127 : i32
    %51 = tpu.dynamic_rotate %49 by %c127_i32_25 dim 1 : vector<16x128xf32>, i32 -> vector<16x128xf32>
    %52 = arith.select %7, %51, %50 : vector<16x128xi1>, vector<16x128xf32>
    %53 = arith.select %9, %50, %51 : vector<16x128xi1>, vector<16x128xf32>
    %54 = arith.addf %52, %49 : vector<16x128xf32>
    %55 = arith.addf %54, %53 : vector<16x128xf32>
    %56 = arith.mulf %13, %15 : vector<16x128xf32>
    %57 = arith.mulf %20, %22 : vector<1x128xf32>
    %58 = arith.mulf %21, %23 : vector<1x128xf32>
    %c1_i32_26 = arith.constant 1 : i32
    %59 = tpu.dynamic_rotate %56 by %c1_i32_26 dim 0 : vector<16x128xf32>, i32 -> vector<16x128xf32>
    %c15_i32_27 = arith.constant 15 : i32
    %60 = tpu.dynamic_rotate %56 by %c15_i32_27 dim 0 : vector<16x128xf32>, i32 -> vector<16x128xf32>
    %61 = vector.shape_cast %57 : vector<1x128xf32> to vector<1x128xf32>
    %62 = vector.broadcast %61 : vector<1x128xf32> to vector<16x128xf32>
    %63 = arith.select %3, %62, %59 : vector<16x128xi1>, vector<16x128xf32>
    %64 = vector.shape_cast %58 : vector<1x128xf32> to vector<1x128xf32>
    %65 = vector.broadcast %64 : vector<1x128xf32> to vector<16x128xf32>
    %66 = arith.select %5, %65, %60 : vector<16x128xi1>, vector<16x128xf32>
    %67 = arith.addf %63, %56 : vector<16x128xf32>
    %68 = arith.addf %67, %66 : vector<16x128xf32>
    %c1_i32_28 = arith.constant 1 : i32
    %69 = tpu.dynamic_rotate %68 by %c1_i32_28 dim 1 : vector<16x128xf32>, i32 -> vector<16x128xf32>
    %c127_i32_29 = arith.constant 127 : i32
    %70 = tpu.dynamic_rotate %68 by %c127_i32_29 dim 1 : vector<16x128xf32>, i32 -> vector<16x128xf32>
    %71 = arith.select %7, %70, %69 : vector<16x128xi1>, vector<16x128xf32>
    %72 = arith.select %9, %69, %70 : vector<16x128xi1>, vector<16x128xf32>
    %73 = arith.addf %71, %68 : vector<16x128xf32>
    %74 = arith.addf %73, %72 : vector<16x128xf32>
    %75 = arith.mulf %13, %13 : vector<16x128xf32>
    %76 = arith.mulf %20, %20 : vector<1x128xf32>
    %77 = arith.mulf %21, %21 : vector<1x128xf32>
    %c1_i32_30 = arith.constant 1 : i32
    %78 = tpu.dynamic_rotate %75 by %c1_i32_30 dim 0 : vector<16x128xf32>, i32 -> vector<16x128xf32>
    %c15_i32_31 = arith.constant 15 : i32
    %79 = tpu.dynamic_rotate %75 by %c15_i32_31 dim 0 : vector<16x128xf32>, i32 -> vector<16x128xf32>
    %80 = vector.shape_cast %76 : vector<1x128xf32> to vector<1x128xf32>
    %81 = vector.broadcast %80 : vector<1x128xf32> to vector<16x128xf32>
    %82 = arith.select %3, %81, %78 : vector<16x128xi1>, vector<16x128xf32>
    %83 = vector.shape_cast %77 : vector<1x128xf32> to vector<1x128xf32>
    %84 = vector.broadcast %83 : vector<1x128xf32> to vector<16x128xf32>
    %85 = arith.select %5, %84, %79 : vector<16x128xi1>, vector<16x128xf32>
    %86 = arith.addf %82, %75 : vector<16x128xf32>
    %87 = arith.addf %86, %85 : vector<16x128xf32>
    %c1_i32_32 = arith.constant 1 : i32
    %88 = tpu.dynamic_rotate %87 by %c1_i32_32 dim 1 : vector<16x128xf32>, i32 -> vector<16x128xf32>
    %c127_i32_33 = arith.constant 127 : i32
    %89 = tpu.dynamic_rotate %87 by %c127_i32_33 dim 1 : vector<16x128xf32>, i32 -> vector<16x128xf32>
    %90 = arith.select %7, %89, %88 : vector<16x128xi1>, vector<16x128xf32>
    %91 = arith.select %9, %88, %89 : vector<16x128xi1>, vector<16x128xf32>
    %92 = arith.addf %90, %87 : vector<16x128xf32>
    %93 = arith.addf %92, %91 : vector<16x128xf32>
    %94 = arith.mulf %15, %15 : vector<16x128xf32>
    %95 = arith.mulf %22, %22 : vector<1x128xf32>
    %96 = arith.mulf %23, %23 : vector<1x128xf32>
    %c1_i32_34 = arith.constant 1 : i32
    %97 = tpu.dynamic_rotate %94 by %c1_i32_34 dim 0 : vector<16x128xf32>, i32 -> vector<16x128xf32>
    %c15_i32_35 = arith.constant 15 : i32
    %98 = tpu.dynamic_rotate %94 by %c15_i32_35 dim 0 : vector<16x128xf32>, i32 -> vector<16x128xf32>
    %99 = vector.shape_cast %95 : vector<1x128xf32> to vector<1x128xf32>
    %100 = vector.broadcast %99 : vector<1x128xf32> to vector<16x128xf32>
    %101 = arith.select %3, %100, %97 : vector<16x128xi1>, vector<16x128xf32>
    %102 = vector.shape_cast %96 : vector<1x128xf32> to vector<1x128xf32>
    %103 = vector.broadcast %102 : vector<1x128xf32> to vector<16x128xf32>
    %104 = arith.select %5, %103, %98 : vector<16x128xi1>, vector<16x128xf32>
    %105 = arith.addf %101, %94 : vector<16x128xf32>
    %106 = arith.addf %105, %104 : vector<16x128xf32>
    %c1_i32_36 = arith.constant 1 : i32
    %107 = tpu.dynamic_rotate %106 by %c1_i32_36 dim 1 : vector<16x128xf32>, i32 -> vector<16x128xf32>
    %c127_i32_37 = arith.constant 127 : i32
    %108 = tpu.dynamic_rotate %106 by %c127_i32_37 dim 1 : vector<16x128xf32>, i32 -> vector<16x128xf32>
    %109 = arith.select %7, %108, %107 : vector<16x128xi1>, vector<16x128xf32>
    %110 = arith.select %9, %107, %108 : vector<16x128xi1>, vector<16x128xf32>
    %111 = arith.addf %109, %106 : vector<16x128xf32>
    %112 = arith.addf %111, %110 : vector<16x128xf32>
    %113 = arith.mulf %39, %39 : vector<16x128xf32>
    %114 = arith.mulf %55, %55 : vector<16x128xf32>
    %115 = arith.mulf %39, %55 : vector<16x128xf32>
    %cst_38 = arith.constant 9.000000e+00 : f32
    %116 = vector.broadcast %cst_38 : f32 to vector<16x128xf32>
    %117 = arith.mulf %116, %74 : vector<16x128xf32>
    %118 = arith.subf %117, %115 : vector<16x128xf32>
    %cst_39 = arith.constant 9.000000e+00 : f32
    %119 = vector.broadcast %cst_39 : f32 to vector<16x128xf32>
    %120 = arith.mulf %119, %93 : vector<16x128xf32>
    %121 = arith.subf %120, %113 : vector<16x128xf32>
    %cst_40 = arith.constant 9.000000e+00 : f32
    %122 = vector.broadcast %cst_40 : f32 to vector<16x128xf32>
    %123 = arith.mulf %122, %112 : vector<16x128xf32>
    %124 = arith.subf %123, %114 : vector<16x128xf32>
    %cst_41 = arith.constant 2.000000e+00 : f32
    %125 = vector.broadcast %cst_41 : f32 to vector<16x128xf32>
    %126 = arith.mulf %125, %115 : vector<16x128xf32>
    %cst_42 = arith.constant 8.100000e-03 : f32
    %127 = vector.broadcast %cst_42 : f32 to vector<16x128xf32>
    %128 = arith.addf %126, %127 : vector<16x128xf32>
    %cst_43 = arith.constant 2.000000e+00 : f32
    %129 = vector.broadcast %cst_43 : f32 to vector<16x128xf32>
    %130 = arith.mulf %129, %118 : vector<16x128xf32>
    %cst_44 = arith.constant 7.290000e-02 : f32
    %131 = vector.broadcast %cst_44 : f32 to vector<16x128xf32>
    %132 = arith.addf %130, %131 : vector<16x128xf32>
    %133 = arith.mulf %128, %132 : vector<16x128xf32>
    %134 = arith.addf %113, %114 : vector<16x128xf32>
    %cst_45 = arith.constant 8.100000e-03 : f32
    %135 = vector.broadcast %cst_45 : f32 to vector<16x128xf32>
    %136 = arith.addf %134, %135 : vector<16x128xf32>
    %137 = arith.addf %121, %124 : vector<16x128xf32>
    %cst_46 = arith.constant 7.290000e-02 : f32
    %138 = vector.broadcast %cst_46 : f32 to vector<16x128xf32>
    %139 = arith.addf %137, %138 : vector<16x128xf32>
    %140 = arith.mulf %136, %139 : vector<16x128xf32>
    %141 = tpu.reciprocal %140 : vector<16x128xf32> -> vector<16x128xf32>
    %142 = arith.mulf %133, %141 : vector<16x128xf32>
    %cst_47 = arith.constant 1.000000e+00 : f32
    %143 = vector.broadcast %cst_47 : f32 to vector<16x128xf32>
    %144 = arith.subf %143, %142 : vector<16x128xf32>
    %cst_48 = arith.constant 5.000000e-01 : f32
    %145 = vector.broadcast %cst_48 : f32 to vector<16x128xf32>
    %146 = arith.mulf %144, %145 : vector<16x128xf32>
    %cst_49 = arith.constant 0.000000e+00 : f32
    %cst_50 = arith.constant 1.000000e+00 : f32
    %147 = vector.broadcast %cst_49 : f32 to vector<16x128xf32>
    %148 = arith.maximumf %147, %146 : vector<16x128xf32>
    %149 = vector.broadcast %cst_50 : f32 to vector<16x128xf32>
    %150 = arith.minimumf %149, %148 : vector<16x128xf32>
    %151 = arith.addf %10, %150 : vector<16x128xf32>
    %152 = arith.subf %13, %15 : vector<16x128xf32>
    %153 = math.absf %152 : vector<16x128xf32>
    %154 = arith.addf %11, %153 : vector<16x128xf32>
    %c0_51 = arith.constant 0 : index
    %c1 = arith.constant 1 : index
    %c0_52 = arith.constant 0 : index
    %c0_53 = arith.constant 0 : index
    %155 = vector.load %arg2[%c0_51, %c1, %c0_52, %c0_53] : memref<1x3x16x128xf32, #tpu.memory_space<vmem>>, vector<1x1x16x128xf32>
    %156 = vector.shape_cast %155 : vector<1x1x16x128xf32> to vector<16x128xf32>
    %c0_54 = arith.constant 0 : index
    %c1_55 = arith.constant 1 : index
    %c0_56 = arith.constant 0 : index
    %c0_57 = arith.constant 0 : index
    %157 = vector.load %arg3[%c0_54, %c1_55, %c0_56, %c0_57] : memref<1x3x16x128xf32, #tpu.memory_space<vmem>>, vector<1x1x16x128xf32>
    %158 = vector.shape_cast %157 : vector<1x1x16x128xf32> to vector<16x128xf32>
    %c0_58 = arith.constant 0 : index
    %c0_59 = arith.constant 0 : index
    %c1_60 = arith.constant 1 : index
    %c0_61 = arith.constant 0 : index
    %c0_62 = arith.constant 0 : index
    %159 = vector.load %arg4[%c0_58, %c0_59, %c1_60, %c0_61, %c0_62] : memref<1x1x3x2x128xf32, #tpu.memory_space<vmem>>, vector<1x1x1x2x128xf32>
    %160 = vector.shape_cast %159 : vector<1x1x1x2x128xf32> to vector<2x128xf32>
    %c0_63 = arith.constant 0 : index
    %c0_64 = arith.constant 0 : index
    %c1_65 = arith.constant 1 : index
    %c0_66 = arith.constant 0 : index
    %c0_67 = arith.constant 0 : index
    %161 = vector.load %arg5[%c0_63, %c0_64, %c1_65, %c0_66, %c0_67] : memref<1x1x3x2x128xf32, #tpu.memory_space<vmem>>, vector<1x1x1x2x128xf32>
    %162 = vector.shape_cast %161 : vector<1x1x1x2x128xf32> to vector<2x128xf32>
    %163 = vector.extract_strided_slice %160 {offsets = [0, 0], sizes = [1, 128], strides = [1, 1]} : vector<2x128xf32> to vector<1x128xf32>
    %164 = vector.extract_strided_slice %160 {offsets = [1, 0], sizes = [1, 128], strides = [1, 1]} : vector<2x128xf32> to vector<1x128xf32>
    %165 = vector.extract_strided_slice %162 {offsets = [0, 0], sizes = [1, 128], strides = [1, 1]} : vector<2x128xf32> to vector<1x128xf32>
    %166 = vector.extract_strided_slice %162 {offsets = [1, 0], sizes = [1, 128], strides = [1, 1]} : vector<2x128xf32> to vector<1x128xf32>
    %c1_i32_68 = arith.constant 1 : i32
    %167 = tpu.dynamic_rotate %156 by %c1_i32_68 dim 0 : vector<16x128xf32>, i32 -> vector<16x128xf32>
    %c15_i32_69 = arith.constant 15 : i32
    %168 = tpu.dynamic_rotate %156 by %c15_i32_69 dim 0 : vector<16x128xf32>, i32 -> vector<16x128xf32>
    %169 = vector.shape_cast %163 : vector<1x128xf32> to vector<1x128xf32>
    %170 = vector.broadcast %169 : vector<1x128xf32> to vector<16x128xf32>
    %171 = arith.select %3, %170, %167 : vector<16x128xi1>, vector<16x128xf32>
    %172 = vector.shape_cast %164 : vector<1x128xf32> to vector<1x128xf32>
    %173 = vector.broadcast %172 : vector<1x128xf32> to vector<16x128xf32>
    %174 = arith.select %5, %173, %168 : vector<16x128xi1>, vector<16x128xf32>
    %175 = arith.addf %171, %156 : vector<16x128xf32>
    %176 = arith.addf %175, %174 : vector<16x128xf32>
    %c1_i32_70 = arith.constant 1 : i32
    %177 = tpu.dynamic_rotate %176 by %c1_i32_70 dim 1 : vector<16x128xf32>, i32 -> vector<16x128xf32>
    %c127_i32_71 = arith.constant 127 : i32
    %178 = tpu.dynamic_rotate %176 by %c127_i32_71 dim 1 : vector<16x128xf32>, i32 -> vector<16x128xf32>
    %179 = arith.select %7, %178, %177 : vector<16x128xi1>, vector<16x128xf32>
    %180 = arith.select %9, %177, %178 : vector<16x128xi1>, vector<16x128xf32>
    %181 = arith.addf %179, %176 : vector<16x128xf32>
    %182 = arith.addf %181, %180 : vector<16x128xf32>
    %c1_i32_72 = arith.constant 1 : i32
    %183 = tpu.dynamic_rotate %158 by %c1_i32_72 dim 0 : vector<16x128xf32>, i32 -> vector<16x128xf32>
    %c15_i32_73 = arith.constant 15 : i32
    %184 = tpu.dynamic_rotate %158 by %c15_i32_73 dim 0 : vector<16x128xf32>, i32 -> vector<16x128xf32>
    %185 = vector.shape_cast %165 : vector<1x128xf32> to vector<1x128xf32>
    %186 = vector.broadcast %185 : vector<1x128xf32> to vector<16x128xf32>
    %187 = arith.select %3, %186, %183 : vector<16x128xi1>, vector<16x128xf32>
    %188 = vector.shape_cast %166 : vector<1x128xf32> to vector<1x128xf32>
    %189 = vector.broadcast %188 : vector<1x128xf32> to vector<16x128xf32>
    %190 = arith.select %5, %189, %184 : vector<16x128xi1>, vector<16x128xf32>
    %191 = arith.addf %187, %158 : vector<16x128xf32>
    %192 = arith.addf %191, %190 : vector<16x128xf32>
    %c1_i32_74 = arith.constant 1 : i32
    %193 = tpu.dynamic_rotate %192 by %c1_i32_74 dim 1 : vector<16x128xf32>, i32 -> vector<16x128xf32>
    %c127_i32_75 = arith.constant 127 : i32
    %194 = tpu.dynamic_rotate %192 by %c127_i32_75 dim 1 : vector<16x128xf32>, i32 -> vector<16x128xf32>
    %195 = arith.select %7, %194, %193 : vector<16x128xi1>, vector<16x128xf32>
    %196 = arith.select %9, %193, %194 : vector<16x128xi1>, vector<16x128xf32>
    %197 = arith.addf %195, %192 : vector<16x128xf32>
    %198 = arith.addf %197, %196 : vector<16x128xf32>
    %199 = arith.mulf %156, %158 : vector<16x128xf32>
    %200 = arith.mulf %163, %165 : vector<1x128xf32>
    %201 = arith.mulf %164, %166 : vector<1x128xf32>
    %c1_i32_76 = arith.constant 1 : i32
    %202 = tpu.dynamic_rotate %199 by %c1_i32_76 dim 0 : vector<16x128xf32>, i32 -> vector<16x128xf32>
    %c15_i32_77 = arith.constant 15 : i32
    %203 = tpu.dynamic_rotate %199 by %c15_i32_77 dim 0 : vector<16x128xf32>, i32 -> vector<16x128xf32>
    %204 = vector.shape_cast %200 : vector<1x128xf32> to vector<1x128xf32>
    %205 = vector.broadcast %204 : vector<1x128xf32> to vector<16x128xf32>
    %206 = arith.select %3, %205, %202 : vector<16x128xi1>, vector<16x128xf32>
    %207 = vector.shape_cast %201 : vector<1x128xf32> to vector<1x128xf32>
    %208 = vector.broadcast %207 : vector<1x128xf32> to vector<16x128xf32>
    %209 = arith.select %5, %208, %203 : vector<16x128xi1>, vector<16x128xf32>
    %210 = arith.addf %206, %199 : vector<16x128xf32>
    %211 = arith.addf %210, %209 : vector<16x128xf32>
    %c1_i32_78 = arith.constant 1 : i32
    %212 = tpu.dynamic_rotate %211 by %c1_i32_78 dim 1 : vector<16x128xf32>, i32 -> vector<16x128xf32>
    %c127_i32_79 = arith.constant 127 : i32
    %213 = tpu.dynamic_rotate %211 by %c127_i32_79 dim 1 : vector<16x128xf32>, i32 -> vector<16x128xf32>
    %214 = arith.select %7, %213, %212 : vector<16x128xi1>, vector<16x128xf32>
    %215 = arith.select %9, %212, %213 : vector<16x128xi1>, vector<16x128xf32>
    %216 = arith.addf %214, %211 : vector<16x128xf32>
    %217 = arith.addf %216, %215 : vector<16x128xf32>
    %218 = arith.mulf %156, %156 : vector<16x128xf32>
    %219 = arith.mulf %163, %163 : vector<1x128xf32>
    %220 = arith.mulf %164, %164 : vector<1x128xf32>
    %c1_i32_80 = arith.constant 1 : i32
    %221 = tpu.dynamic_rotate %218 by %c1_i32_80 dim 0 : vector<16x128xf32>, i32 -> vector<16x128xf32>
    %c15_i32_81 = arith.constant 15 : i32
    %222 = tpu.dynamic_rotate %218 by %c15_i32_81 dim 0 : vector<16x128xf32>, i32 -> vector<16x128xf32>
    %223 = vector.shape_cast %219 : vector<1x128xf32> to vector<1x128xf32>
    %224 = vector.broadcast %223 : vector<1x128xf32> to vector<16x128xf32>
    %225 = arith.select %3, %224, %221 : vector<16x128xi1>, vector<16x128xf32>
    %226 = vector.shape_cast %220 : vector<1x128xf32> to vector<1x128xf32>
    %227 = vector.broadcast %226 : vector<1x128xf32> to vector<16x128xf32>
    %228 = arith.select %5, %227, %222 : vector<16x128xi1>, vector<16x128xf32>
    %229 = arith.addf %225, %218 : vector<16x128xf32>
    %230 = arith.addf %229, %228 : vector<16x128xf32>
    %c1_i32_82 = arith.constant 1 : i32
    %231 = tpu.dynamic_rotate %230 by %c1_i32_82 dim 1 : vector<16x128xf32>, i32 -> vector<16x128xf32>
    %c127_i32_83 = arith.constant 127 : i32
    %232 = tpu.dynamic_rotate %230 by %c127_i32_83 dim 1 : vector<16x128xf32>, i32 -> vector<16x128xf32>
    %233 = arith.select %7, %232, %231 : vector<16x128xi1>, vector<16x128xf32>
    %234 = arith.select %9, %231, %232 : vector<16x128xi1>, vector<16x128xf32>
    %235 = arith.addf %233, %230 : vector<16x128xf32>
    %236 = arith.addf %235, %234 : vector<16x128xf32>
    %237 = arith.mulf %158, %158 : vector<16x128xf32>
    %238 = arith.mulf %165, %165 : vector<1x128xf32>
    %239 = arith.mulf %166, %166 : vector<1x128xf32>
    %c1_i32_84 = arith.constant 1 : i32
    %240 = tpu.dynamic_rotate %237 by %c1_i32_84 dim 0 : vector<16x128xf32>, i32 -> vector<16x128xf32>
    %c15_i32_85 = arith.constant 15 : i32
    %241 = tpu.dynamic_rotate %237 by %c15_i32_85 dim 0 : vector<16x128xf32>, i32 -> vector<16x128xf32>
    %242 = vector.shape_cast %238 : vector<1x128xf32> to vector<1x128xf32>
    %243 = vector.broadcast %242 : vector<1x128xf32> to vector<16x128xf32>
    %244 = arith.select %3, %243, %240 : vector<16x128xi1>, vector<16x128xf32>
    %245 = vector.shape_cast %239 : vector<1x128xf32> to vector<1x128xf32>
    %246 = vector.broadcast %245 : vector<1x128xf32> to vector<16x128xf32>
    %247 = arith.select %5, %246, %241 : vector<16x128xi1>, vector<16x128xf32>
    %248 = arith.addf %244, %237 : vector<16x128xf32>
    %249 = arith.addf %248, %247 : vector<16x128xf32>
    %c1_i32_86 = arith.constant 1 : i32
    %250 = tpu.dynamic_rotate %249 by %c1_i32_86 dim 1 : vector<16x128xf32>, i32 -> vector<16x128xf32>
    %c127_i32_87 = arith.constant 127 : i32
    %251 = tpu.dynamic_rotate %249 by %c127_i32_87 dim 1 : vector<16x128xf32>, i32 -> vector<16x128xf32>
    %252 = arith.select %7, %251, %250 : vector<16x128xi1>, vector<16x128xf32>
    %253 = arith.select %9, %250, %251 : vector<16x128xi1>, vector<16x128xf32>
    %254 = arith.addf %252, %249 : vector<16x128xf32>
    %255 = arith.addf %254, %253 : vector<16x128xf32>
    %256 = arith.mulf %182, %182 : vector<16x128xf32>
    %257 = arith.mulf %198, %198 : vector<16x128xf32>
    %258 = arith.mulf %182, %198 : vector<16x128xf32>
    %cst_88 = arith.constant 9.000000e+00 : f32
    %259 = vector.broadcast %cst_88 : f32 to vector<16x128xf32>
    %260 = arith.mulf %259, %217 : vector<16x128xf32>
    %261 = arith.subf %260, %258 : vector<16x128xf32>
    %cst_89 = arith.constant 9.000000e+00 : f32
    %262 = vector.broadcast %cst_89 : f32 to vector<16x128xf32>
    %263 = arith.mulf %262, %236 : vector<16x128xf32>
    %264 = arith.subf %263, %256 : vector<16x128xf32>
    %cst_90 = arith.constant 9.000000e+00 : f32
    %265 = vector.broadcast %cst_90 : f32 to vector<16x128xf32>
    %266 = arith.mulf %265, %255 : vector<16x128xf32>
    %267 = arith.subf %266, %257 : vector<16x128xf32>
    %cst_91 = arith.constant 2.000000e+00 : f32
    %268 = vector.broadcast %cst_91 : f32 to vector<16x128xf32>
    %269 = arith.mulf %268, %258 : vector<16x128xf32>
    %cst_92 = arith.constant 8.100000e-03 : f32
    %270 = vector.broadcast %cst_92 : f32 to vector<16x128xf32>
    %271 = arith.addf %269, %270 : vector<16x128xf32>
    %cst_93 = arith.constant 2.000000e+00 : f32
    %272 = vector.broadcast %cst_93 : f32 to vector<16x128xf32>
    %273 = arith.mulf %272, %261 : vector<16x128xf32>
    %cst_94 = arith.constant 7.290000e-02 : f32
    %274 = vector.broadcast %cst_94 : f32 to vector<16x128xf32>
    %275 = arith.addf %273, %274 : vector<16x128xf32>
    %276 = arith.mulf %271, %275 : vector<16x128xf32>
    %277 = arith.addf %256, %257 : vector<16x128xf32>
    %cst_95 = arith.constant 8.100000e-03 : f32
    %278 = vector.broadcast %cst_95 : f32 to vector<16x128xf32>
    %279 = arith.addf %277, %278 : vector<16x128xf32>
    %280 = arith.addf %264, %267 : vector<16x128xf32>
    %cst_96 = arith.constant 7.290000e-02 : f32
    %281 = vector.broadcast %cst_96 : f32 to vector<16x128xf32>
    %282 = arith.addf %280, %281 : vector<16x128xf32>
    %283 = arith.mulf %279, %282 : vector<16x128xf32>
    %284 = tpu.reciprocal %283 : vector<16x128xf32> -> vector<16x128xf32>
    %285 = arith.mulf %276, %284 : vector<16x128xf32>
    %cst_97 = arith.constant 1.000000e+00 : f32
    %286 = vector.broadcast %cst_97 : f32 to vector<16x128xf32>
    %287 = arith.subf %286, %285 : vector<16x128xf32>
    %cst_98 = arith.constant 5.000000e-01 : f32
    %288 = vector.broadcast %cst_98 : f32 to vector<16x128xf32>
    %289 = arith.mulf %287, %288 : vector<16x128xf32>
    %cst_99 = arith.constant 0.000000e+00 : f32
    %cst_100 = arith.constant 1.000000e+00 : f32
    %290 = vector.broadcast %cst_99 : f32 to vector<16x128xf32>
    %291 = arith.maximumf %290, %289 : vector<16x128xf32>
    %292 = vector.broadcast %cst_100 : f32 to vector<16x128xf32>
    %293 = arith.minimumf %292, %291 : vector<16x128xf32>
    %294 = arith.addf %151, %293 : vector<16x128xf32>
    %295 = arith.subf %156, %158 : vector<16x128xf32>
    %296 = math.absf %295 : vector<16x128xf32>
    %297 = arith.addf %154, %296 : vector<16x128xf32>
    %c0_101 = arith.constant 0 : index
    %c2 = arith.constant 2 : index
    %c0_102 = arith.constant 0 : index
    %c0_103 = arith.constant 0 : index
    %298 = vector.load %arg2[%c0_101, %c2, %c0_102, %c0_103] : memref<1x3x16x128xf32, #tpu.memory_space<vmem>>, vector<1x1x16x128xf32>
    %299 = vector.shape_cast %298 : vector<1x1x16x128xf32> to vector<16x128xf32>
    %c0_104 = arith.constant 0 : index
    %c2_105 = arith.constant 2 : index
    %c0_106 = arith.constant 0 : index
    %c0_107 = arith.constant 0 : index
    %300 = vector.load %arg3[%c0_104, %c2_105, %c0_106, %c0_107] : memref<1x3x16x128xf32, #tpu.memory_space<vmem>>, vector<1x1x16x128xf32>
    %301 = vector.shape_cast %300 : vector<1x1x16x128xf32> to vector<16x128xf32>
    %c0_108 = arith.constant 0 : index
    %c0_109 = arith.constant 0 : index
    %c2_110 = arith.constant 2 : index
    %c0_111 = arith.constant 0 : index
    %c0_112 = arith.constant 0 : index
    %302 = vector.load %arg4[%c0_108, %c0_109, %c2_110, %c0_111, %c0_112] : memref<1x1x3x2x128xf32, #tpu.memory_space<vmem>>, vector<1x1x1x2x128xf32>
    %303 = vector.shape_cast %302 : vector<1x1x1x2x128xf32> to vector<2x128xf32>
    %c0_113 = arith.constant 0 : index
    %c0_114 = arith.constant 0 : index
    %c2_115 = arith.constant 2 : index
    %c0_116 = arith.constant 0 : index
    %c0_117 = arith.constant 0 : index
    %304 = vector.load %arg5[%c0_113, %c0_114, %c2_115, %c0_116, %c0_117] : memref<1x1x3x2x128xf32, #tpu.memory_space<vmem>>, vector<1x1x1x2x128xf32>
    %305 = vector.shape_cast %304 : vector<1x1x1x2x128xf32> to vector<2x128xf32>
    %306 = vector.extract_strided_slice %303 {offsets = [0, 0], sizes = [1, 128], strides = [1, 1]} : vector<2x128xf32> to vector<1x128xf32>
    %307 = vector.extract_strided_slice %303 {offsets = [1, 0], sizes = [1, 128], strides = [1, 1]} : vector<2x128xf32> to vector<1x128xf32>
    %308 = vector.extract_strided_slice %305 {offsets = [0, 0], sizes = [1, 128], strides = [1, 1]} : vector<2x128xf32> to vector<1x128xf32>
    %309 = vector.extract_strided_slice %305 {offsets = [1, 0], sizes = [1, 128], strides = [1, 1]} : vector<2x128xf32> to vector<1x128xf32>
    %c1_i32_118 = arith.constant 1 : i32
    %310 = tpu.dynamic_rotate %299 by %c1_i32_118 dim 0 : vector<16x128xf32>, i32 -> vector<16x128xf32>
    %c15_i32_119 = arith.constant 15 : i32
    %311 = tpu.dynamic_rotate %299 by %c15_i32_119 dim 0 : vector<16x128xf32>, i32 -> vector<16x128xf32>
    %312 = vector.shape_cast %306 : vector<1x128xf32> to vector<1x128xf32>
    %313 = vector.broadcast %312 : vector<1x128xf32> to vector<16x128xf32>
    %314 = arith.select %3, %313, %310 : vector<16x128xi1>, vector<16x128xf32>
    %315 = vector.shape_cast %307 : vector<1x128xf32> to vector<1x128xf32>
    %316 = vector.broadcast %315 : vector<1x128xf32> to vector<16x128xf32>
    %317 = arith.select %5, %316, %311 : vector<16x128xi1>, vector<16x128xf32>
    %318 = arith.addf %314, %299 : vector<16x128xf32>
    %319 = arith.addf %318, %317 : vector<16x128xf32>
    %c1_i32_120 = arith.constant 1 : i32
    %320 = tpu.dynamic_rotate %319 by %c1_i32_120 dim 1 : vector<16x128xf32>, i32 -> vector<16x128xf32>
    %c127_i32_121 = arith.constant 127 : i32
    %321 = tpu.dynamic_rotate %319 by %c127_i32_121 dim 1 : vector<16x128xf32>, i32 -> vector<16x128xf32>
    %322 = arith.select %7, %321, %320 : vector<16x128xi1>, vector<16x128xf32>
    %323 = arith.select %9, %320, %321 : vector<16x128xi1>, vector<16x128xf32>
    %324 = arith.addf %322, %319 : vector<16x128xf32>
    %325 = arith.addf %324, %323 : vector<16x128xf32>
    %c1_i32_122 = arith.constant 1 : i32
    %326 = tpu.dynamic_rotate %301 by %c1_i32_122 dim 0 : vector<16x128xf32>, i32 -> vector<16x128xf32>
    %c15_i32_123 = arith.constant 15 : i32
    %327 = tpu.dynamic_rotate %301 by %c15_i32_123 dim 0 : vector<16x128xf32>, i32 -> vector<16x128xf32>
    %328 = vector.shape_cast %308 : vector<1x128xf32> to vector<1x128xf32>
    %329 = vector.broadcast %328 : vector<1x128xf32> to vector<16x128xf32>
    %330 = arith.select %3, %329, %326 : vector<16x128xi1>, vector<16x128xf32>
    %331 = vector.shape_cast %309 : vector<1x128xf32> to vector<1x128xf32>
    %332 = vector.broadcast %331 : vector<1x128xf32> to vector<16x128xf32>
    %333 = arith.select %5, %332, %327 : vector<16x128xi1>, vector<16x128xf32>
    %334 = arith.addf %330, %301 : vector<16x128xf32>
    %335 = arith.addf %334, %333 : vector<16x128xf32>
    %c1_i32_124 = arith.constant 1 : i32
    %336 = tpu.dynamic_rotate %335 by %c1_i32_124 dim 1 : vector<16x128xf32>, i32 -> vector<16x128xf32>
    %c127_i32_125 = arith.constant 127 : i32
    %337 = tpu.dynamic_rotate %335 by %c127_i32_125 dim 1 : vector<16x128xf32>, i32 -> vector<16x128xf32>
    %338 = arith.select %7, %337, %336 : vector<16x128xi1>, vector<16x128xf32>
    %339 = arith.select %9, %336, %337 : vector<16x128xi1>, vector<16x128xf32>
    %340 = arith.addf %338, %335 : vector<16x128xf32>
    %341 = arith.addf %340, %339 : vector<16x128xf32>
    %342 = arith.mulf %299, %301 : vector<16x128xf32>
    %343 = arith.mulf %306, %308 : vector<1x128xf32>
    %344 = arith.mulf %307, %309 : vector<1x128xf32>
    %c1_i32_126 = arith.constant 1 : i32
    %345 = tpu.dynamic_rotate %342 by %c1_i32_126 dim 0 : vector<16x128xf32>, i32 -> vector<16x128xf32>
    %c15_i32_127 = arith.constant 15 : i32
    %346 = tpu.dynamic_rotate %342 by %c15_i32_127 dim 0 : vector<16x128xf32>, i32 -> vector<16x128xf32>
    %347 = vector.shape_cast %343 : vector<1x128xf32> to vector<1x128xf32>
    %348 = vector.broadcast %347 : vector<1x128xf32> to vector<16x128xf32>
    %349 = arith.select %3, %348, %345 : vector<16x128xi1>, vector<16x128xf32>
    %350 = vector.shape_cast %344 : vector<1x128xf32> to vector<1x128xf32>
    %351 = vector.broadcast %350 : vector<1x128xf32> to vector<16x128xf32>
    %352 = arith.select %5, %351, %346 : vector<16x128xi1>, vector<16x128xf32>
    %353 = arith.addf %349, %342 : vector<16x128xf32>
    %354 = arith.addf %353, %352 : vector<16x128xf32>
    %c1_i32_128 = arith.constant 1 : i32
    %355 = tpu.dynamic_rotate %354 by %c1_i32_128 dim 1 : vector<16x128xf32>, i32 -> vector<16x128xf32>
    %c127_i32_129 = arith.constant 127 : i32
    %356 = tpu.dynamic_rotate %354 by %c127_i32_129 dim 1 : vector<16x128xf32>, i32 -> vector<16x128xf32>
    %357 = arith.select %7, %356, %355 : vector<16x128xi1>, vector<16x128xf32>
    %358 = arith.select %9, %355, %356 : vector<16x128xi1>, vector<16x128xf32>
    %359 = arith.addf %357, %354 : vector<16x128xf32>
    %360 = arith.addf %359, %358 : vector<16x128xf32>
    %361 = arith.mulf %299, %299 : vector<16x128xf32>
    %362 = arith.mulf %306, %306 : vector<1x128xf32>
    %363 = arith.mulf %307, %307 : vector<1x128xf32>
    %c1_i32_130 = arith.constant 1 : i32
    %364 = tpu.dynamic_rotate %361 by %c1_i32_130 dim 0 : vector<16x128xf32>, i32 -> vector<16x128xf32>
    %c15_i32_131 = arith.constant 15 : i32
    %365 = tpu.dynamic_rotate %361 by %c15_i32_131 dim 0 : vector<16x128xf32>, i32 -> vector<16x128xf32>
    %366 = vector.shape_cast %362 : vector<1x128xf32> to vector<1x128xf32>
    %367 = vector.broadcast %366 : vector<1x128xf32> to vector<16x128xf32>
    %368 = arith.select %3, %367, %364 : vector<16x128xi1>, vector<16x128xf32>
    %369 = vector.shape_cast %363 : vector<1x128xf32> to vector<1x128xf32>
    %370 = vector.broadcast %369 : vector<1x128xf32> to vector<16x128xf32>
    %371 = arith.select %5, %370, %365 : vector<16x128xi1>, vector<16x128xf32>
    %372 = arith.addf %368, %361 : vector<16x128xf32>
    %373 = arith.addf %372, %371 : vector<16x128xf32>
    %c1_i32_132 = arith.constant 1 : i32
    %374 = tpu.dynamic_rotate %373 by %c1_i32_132 dim 1 : vector<16x128xf32>, i32 -> vector<16x128xf32>
    %c127_i32_133 = arith.constant 127 : i32
    %375 = tpu.dynamic_rotate %373 by %c127_i32_133 dim 1 : vector<16x128xf32>, i32 -> vector<16x128xf32>
    %376 = arith.select %7, %375, %374 : vector<16x128xi1>, vector<16x128xf32>
    %377 = arith.select %9, %374, %375 : vector<16x128xi1>, vector<16x128xf32>
    %378 = arith.addf %376, %373 : vector<16x128xf32>
    %379 = arith.addf %378, %377 : vector<16x128xf32>
    %380 = arith.mulf %301, %301 : vector<16x128xf32>
    %381 = arith.mulf %308, %308 : vector<1x128xf32>
    %382 = arith.mulf %309, %309 : vector<1x128xf32>
    %c1_i32_134 = arith.constant 1 : i32
    %383 = tpu.dynamic_rotate %380 by %c1_i32_134 dim 0 : vector<16x128xf32>, i32 -> vector<16x128xf32>
    %c15_i32_135 = arith.constant 15 : i32
    %384 = tpu.dynamic_rotate %380 by %c15_i32_135 dim 0 : vector<16x128xf32>, i32 -> vector<16x128xf32>
    %385 = vector.shape_cast %381 : vector<1x128xf32> to vector<1x128xf32>
    %386 = vector.broadcast %385 : vector<1x128xf32> to vector<16x128xf32>
    %387 = arith.select %3, %386, %383 : vector<16x128xi1>, vector<16x128xf32>
    %388 = vector.shape_cast %382 : vector<1x128xf32> to vector<1x128xf32>
    %389 = vector.broadcast %388 : vector<1x128xf32> to vector<16x128xf32>
    %390 = arith.select %5, %389, %384 : vector<16x128xi1>, vector<16x128xf32>
    %391 = arith.addf %387, %380 : vector<16x128xf32>
    %392 = arith.addf %391, %390 : vector<16x128xf32>
    %c1_i32_136 = arith.constant 1 : i32
    %393 = tpu.dynamic_rotate %392 by %c1_i32_136 dim 1 : vector<16x128xf32>, i32 -> vector<16x128xf32>
    %c127_i32_137 = arith.constant 127 : i32
    %394 = tpu.dynamic_rotate %392 by %c127_i32_137 dim 1 : vector<16x128xf32>, i32 -> vector<16x128xf32>
    %395 = arith.select %7, %394, %393 : vector<16x128xi1>, vector<16x128xf32>
    %396 = arith.select %9, %393, %394 : vector<16x128xi1>, vector<16x128xf32>
    %397 = arith.addf %395, %392 : vector<16x128xf32>
    %398 = arith.addf %397, %396 : vector<16x128xf32>
    %399 = arith.mulf %325, %325 : vector<16x128xf32>
    %400 = arith.mulf %341, %341 : vector<16x128xf32>
    %401 = arith.mulf %325, %341 : vector<16x128xf32>
    %cst_138 = arith.constant 9.000000e+00 : f32
    %402 = vector.broadcast %cst_138 : f32 to vector<16x128xf32>
    %403 = arith.mulf %402, %360 : vector<16x128xf32>
    %404 = arith.subf %403, %401 : vector<16x128xf32>
    %cst_139 = arith.constant 9.000000e+00 : f32
    %405 = vector.broadcast %cst_139 : f32 to vector<16x128xf32>
    %406 = arith.mulf %405, %379 : vector<16x128xf32>
    %407 = arith.subf %406, %399 : vector<16x128xf32>
    %cst_140 = arith.constant 9.000000e+00 : f32
    %408 = vector.broadcast %cst_140 : f32 to vector<16x128xf32>
    %409 = arith.mulf %408, %398 : vector<16x128xf32>
    %410 = arith.subf %409, %400 : vector<16x128xf32>
    %cst_141 = arith.constant 2.000000e+00 : f32
    %411 = vector.broadcast %cst_141 : f32 to vector<16x128xf32>
    %412 = arith.mulf %411, %401 : vector<16x128xf32>
    %cst_142 = arith.constant 8.100000e-03 : f32
    %413 = vector.broadcast %cst_142 : f32 to vector<16x128xf32>
    %414 = arith.addf %412, %413 : vector<16x128xf32>
    %cst_143 = arith.constant 2.000000e+00 : f32
    %415 = vector.broadcast %cst_143 : f32 to vector<16x128xf32>
    %416 = arith.mulf %415, %404 : vector<16x128xf32>
    %cst_144 = arith.constant 7.290000e-02 : f32
    %417 = vector.broadcast %cst_144 : f32 to vector<16x128xf32>
    %418 = arith.addf %416, %417 : vector<16x128xf32>
    %419 = arith.mulf %414, %418 : vector<16x128xf32>
    %420 = arith.addf %399, %400 : vector<16x128xf32>
    %cst_145 = arith.constant 8.100000e-03 : f32
    %421 = vector.broadcast %cst_145 : f32 to vector<16x128xf32>
    %422 = arith.addf %420, %421 : vector<16x128xf32>
    %423 = arith.addf %407, %410 : vector<16x128xf32>
    %cst_146 = arith.constant 7.290000e-02 : f32
    %424 = vector.broadcast %cst_146 : f32 to vector<16x128xf32>
    %425 = arith.addf %423, %424 : vector<16x128xf32>
    %426 = arith.mulf %422, %425 : vector<16x128xf32>
    %427 = tpu.reciprocal %426 : vector<16x128xf32> -> vector<16x128xf32>
    %428 = arith.mulf %419, %427 : vector<16x128xf32>
    %cst_147 = arith.constant 1.000000e+00 : f32
    %429 = vector.broadcast %cst_147 : f32 to vector<16x128xf32>
    %430 = arith.subf %429, %428 : vector<16x128xf32>
    %cst_148 = arith.constant 5.000000e-01 : f32
    %431 = vector.broadcast %cst_148 : f32 to vector<16x128xf32>
    %432 = arith.mulf %430, %431 : vector<16x128xf32>
    %cst_149 = arith.constant 0.000000e+00 : f32
    %cst_150 = arith.constant 1.000000e+00 : f32
    %433 = vector.broadcast %cst_149 : f32 to vector<16x128xf32>
    %434 = arith.maximumf %433, %432 : vector<16x128xf32>
    %435 = vector.broadcast %cst_150 : f32 to vector<16x128xf32>
    %436 = arith.minimumf %435, %434 : vector<16x128xf32>
    %437 = arith.addf %294, %436 : vector<16x128xf32>
    %438 = arith.subf %299, %301 : vector<16x128xf32>
    %439 = math.absf %438 : vector<16x128xf32>
    %440 = arith.addf %297, %439 : vector<16x128xf32>
    %cst_151 = arith.constant 0.283333331 : f32
    %441 = vector.broadcast %cst_151 : f32 to vector<16x128xf32>
    %442 = arith.mulf %441, %437 : vector<16x128xf32>
    %cst_152 = arith.constant 5.000000e-02 : f32
    %443 = vector.broadcast %cst_152 : f32 to vector<16x128xf32>
    %444 = arith.mulf %443, %440 : vector<16x128xf32>
    %445 = arith.addf %442, %444 : vector<16x128xf32>
    %c0_153 = arith.constant 0 : index
    %c0_154 = arith.constant 0 : index
    %c0_155 = arith.constant 0 : index
    %c0_156 = arith.constant 0 : index
    %446 = vector.load %arg6[%c0_153, %c0_154, %c0_155, %c0_156] : memref<1x1x16x128xf32, #tpu.memory_space<vmem>>, vector<1x1x16x128xf32>
    %447 = vector.shape_cast %446 : vector<1x1x16x128xf32> to vector<16x128xf32>
    %448 = vector.shape_cast %445 : vector<16x128xf32> to vector<1x1x16x128xf32>
    tpu.vector_store %arg6[%c0_153, %c0_154, %c0_155, %c0_156], %448 {strides = array<i32>} : memref<1x1x16x128xf32, #tpu.memory_space<vmem>>, vector<1x1x16x128xf32>,
    %c16_i32 = arith.constant 16 : i32
    %449 = vector.broadcast %c16_i32 : i32 to vector<16x128xi32>
    %450 = arith.cmpi slt, %1, %449 : vector<16x128xi32>
    %cst_157 = arith.constant 0.000000e+00 : f32
    %451 = vector.broadcast %cst_157 : f32 to vector<16x128xf32>
    %452 = arith.select %450, %445, %451 : vector<16x128xi1>, vector<16x128xf32>
    %453 = vector.shape_cast %452 : vector<16x128xf32> to vector<1x16x128xf32>
    %cst_158 = arith.constant dense<0.000000e+00> : vector<1xf32>
    %454 = vector.multi_reduction <add>, %453, %cst_158 [1, 2] : vector<1x16x128xf32> to vector<1xf32>
    %455 = vector.shape_cast %454 : vector<1xf32> to vector<1x1x1xf32>
    %456 = vector.extract %455[0, 0, 0] : f32 from vector<1x1x1xf32>
    %457 = arith.mulf %452, %452 : vector<16x128xf32>
    %458 = vector.shape_cast %457 : vector<16x128xf32> to vector<1x16x128xf32>
    %cst_159 = arith.constant dense<0.000000e+00> : vector<1xf32>
    %459 = vector.multi_reduction <add>, %458, %cst_159 [1, 2] : vector<1x16x128xf32> to vector<1xf32>
    %460 = vector.shape_cast %459 : vector<1xf32> to vector<1x1x1xf32>
    %461 = vector.extract %460[0, 0, 0] : f32 from vector<1x1x1xf32>
    %462 = tpu.iota {dimensions = array<i32: 1>} : vector<1x128xi32>
    %c0_i32_160 = arith.constant 0 : i32
    %463 = vector.broadcast %c0_i32_160 : i32 to vector<1x128xi32>
    %464 = arith.cmpi eq, %462, %463 : vector<1x128xi32>
    %c1_i32_161 = arith.constant 1 : i32
    %465 = vector.broadcast %c1_i32_161 : i32 to vector<1x128xi32>
    %466 = arith.cmpi eq, %462, %465 : vector<1x128xi32>
    %cst_162 = arith.constant 0.000000e+00 : f32
    %467 = vector.broadcast %461 : f32 to vector<1x128xf32>
    %468 = vector.broadcast %cst_162 : f32 to vector<1x128xf32>
    %469 = arith.select %466, %467, %468 : vector<1x128xi1>, vector<1x128xf32>
    %470 = vector.broadcast %456 : f32 to vector<1x128xf32>
    %471 = arith.select %464, %470, %469 : vector<1x128xi1>, vector<1x128xf32>
    %c0_163 = arith.constant 0 : index
    %c0_164 = arith.constant 0 : index
    %c0_165 = arith.constant 0 : index
    %c0_166 = arith.constant 0 : index
    %472 = vector.load %arg7[%c0_163, %c0_164, %c0_165, %c0_166] : memref<1x1x1x128xf32, #tpu.memory_space<vmem>>, vector<1x1x1x128xf32>
    %473 = vector.shape_cast %472 : vector<1x1x1x128xf32> to vector<1x128xf32>
    %474 = vector.shape_cast %471 : vector<1x128xf32> to vector<1x1x1x128xf32>
    tpu.vector_store %arg7[%c0_163, %c0_164, %c0_165, %c0_166], %474 {strides = array<i32>} : memref<1x1x1x128xf32, #tpu.memory_space<vmem>>, vector<1x1x1x128xf32>,
    return
  }
  func.func @transform_0(%arg0: i32, %arg1: i32) -> (i32, i32, i32, i32) {
    %c0_i32 = arith.constant 0 : i32
    %c0_i32_0 = arith.constant 0 : i32
    %c0_i32_1 = arith.constant 0 : i32
    return %arg0, %c0_i32, %arg1, %c0_i32_0 : i32, i32, i32, i32
  }
  func.func @transform_1(%arg0: i32, %arg1: i32) -> (i32, i32, i32, i32) {
    %c0_i32 = arith.constant 0 : i32
    %c0_i32_0 = arith.constant 0 : i32
    %c0_i32_1 = arith.constant 0 : i32
    return %arg0, %c0_i32, %arg1, %c0_i32_0 : i32, i32, i32, i32
  }
  func.func @transform_2(%arg0: i32, %arg1: i32) -> (i32, i32, i32, i32, i32) {
    %c0_i32 = arith.constant 0 : i32
    %c0_i32_0 = arith.constant 0 : i32
    %c0_i32_1 = arith.constant 0 : i32
    %c0_i32_2 = arith.constant 0 : i32
    return %arg0, %arg1, %c0_i32, %c0_i32_0, %c0_i32_1 : i32, i32, i32, i32, i32
  }
  func.func @transform_3(%arg0: i32, %arg1: i32) -> (i32, i32, i32, i32, i32) {
    %c0_i32 = arith.constant 0 : i32
    %c0_i32_0 = arith.constant 0 : i32
    %c0_i32_1 = arith.constant 0 : i32
    %c0_i32_2 = arith.constant 0 : i32
    return %arg0, %arg1, %c0_i32, %c0_i32_0, %c0_i32_1 : i32, i32, i32, i32, i32
  }
  func.func @transform_4(%arg0: i32, %arg1: i32) -> (i32, i32, i32, i32) {
    %c0_i32 = arith.constant 0 : i32
    %c0_i32_0 = arith.constant 0 : i32
    %c0_i32_1 = arith.constant 0 : i32
    return %arg0, %c0_i32, %arg1, %c0_i32_0 : i32, i32, i32, i32
  }
  func.func @transform_5(%arg0: i32, %arg1: i32) -> (i32, i32, i32, i32) {
    %c0_i32 = arith.constant 0 : i32
    %c0_i32_0 = arith.constant 0 : i32
    %c0_i32_1 = arith.constant 0 : i32
    return %arg0, %arg1, %c0_i32, %c0_i32_0 : i32, i32, i32, i32
  }
}

</mosaic_0001>

<llo_original>
// kernel: photometric_loss.1
$region0: #{photometric_loss.1}
  #allocation0 [shape = 'u32[]', space=smem, size = 0x4, offset = 0x4, fixed_abs, tag = 'smem constant byte address 0x4 - core index']
  #allocation1 [shape = 'u32[144,128]{1,0:T(1,128)}', space=vmem, size = 0x12000, scoped, tag = 'internal scratch']
  %s0 = inlined_call_operand.vmem [shape: f32[2,3,16,128], index: 0, kind: input, shape index: {}]
  %s1 = inlined_call_operand.vmem [shape: f32[2,3,16,128], index: 1, kind: input, shape index: {}]
  %s2 = inlined_call_operand.vmem [shape: f32[2,1,3,2,128], index: 2, kind: input, shape index: {}]
  %s3 = inlined_call_operand.vmem [shape: f32[2,1,3,2,128], index: 3, kind: input, shape index: {}]
  %s4 = inlined_call_operand.vmem [shape: f32[2,1,16,128], index: 4, kind: output, shape index: {0}]
  %s5 = inlined_call_operand.vmem [shape: f32[2,1,1,128], index: 5, kind: output, shape index: {1}]
  %6 = xla_tuple %s4, %s5
  %s7 = sld [smem:[#allocation0]]
  $region57: #{photometric_loss.1} parent=0
    _
  %s9 = ssub.s32 1, %s7
  %s10 = scalar_select 0, %s9, %s7
  loop: start=0, step=1, limit=4
  $region2: #{photometric_loss.1} parent=0 // loop_pre_header
    _
  $region3: #{photometric_loss.1} parent=0 // loop_header
    %s12 = sphi 0, %s16
    %p13 = scmp.ge.s32.totalorder %s12, 4
    %s19 = sphi 0, %s31
    %s20 = sphi 0, %s27
    %s21 = sphi 0, %s19
    %s22 = sphi 0, %s20
    %s23 = sphi 0, %s21
    %s24 = sphi 0, %s22
    %s36 = sphi 0, %s38
    %s39 = sphi 0, %s36
    %s40 = sphi 0, %s39
    %s56 = sphi 0, %s40
    %s64 = sphi 0, %s66
    %s67 = sphi 0, %s64
    %s68 = sphi 0, %s67
    %s84 = sphi 0, %s68
    %s92 = sphi 0, %s94
    %s95 = sphi 0, %s92
    %s96 = sphi 0, %s95
    %s112 = sphi 0, %s96
    %s120 = sphi 0, %s122
    %s123 = sphi 0, %s120
    %s124 = sphi 0, %s123
    %s140 = sphi 0, %s124
    %s148 = sphi 0, %s150
    %s151 = sphi 0, %s148
    %s152 = sphi 0, %s151
    %s168 = sphi 0, %s152
    %s176 = sphi 0, %s178
    %s179 = sphi 0, %s176
    %s180 = sphi 0, %s179
    %s196 = sphi 0, %s180
  $region4: #{photometric_loss.1} parent=0 // loop_header_branch
    %15 = sbr.rel (%p13) target = $region8
  $region5: #{photometric_loss.1} parent=0 // loop_body
    %s17 = ssub.s32 %s12, 1
    %s18 = ssub.s32 %s12, 2
    %s25 = sadd.s32 1, %s20
    %p26 = scmp.ge.s32.totalorder %s25, 1
    %s27 = scalar_select %p26, 0, %s25
    %s28 = sadd.s32 1, %s19
    %s29 = scalar_select %p26, %s28, %s19
    %p30 = scmp.ge.s32.totalorder %s29, 2
    %s31 = scalar_select %p30, 0, %s29
    %s32 = ssub.s32 %s19, %s31
    %s33 = ssub.s32 %s20, %s27
    %s34 = sor.u32 %s32, %s33
    %p35 = scmp.eq.s32.totalorder %s34, 0
    %s37 = sadd.s32 %s36, 1
    %s38 = scalar_select %p35, %s36, %s37
    %p41 = pneg %p35
    %p42 = scmp.eq.s32.totalorder %s12, 1
    %p43 = por %p41, %p42
    %p44 = scmp.ne.s32.totalorder %s36, %s39
    %p45 = scmp.eq.s32.totalorder %s12, 0
    %p46 = por %p44, %p45
    %p47 = scmp.ne.s32.totalorder %s36, %s39
    %p48 = scmp.eq.s32.totalorder %s17, 1
    %p49 = por %p47, %p48
    %p50 = scmp.ne.s32.totalorder %s39, %s40
    %p51 = scmp.eq.s32.totalorder %s17, 0
    %p52 = por %p50, %p51
    %p53 = scmp.ne.s32.totalorder %s39, %s40
    %p54 = scmp.eq.s32.totalorder %s18, 1
    %p55 = por %p53, %p54
    %p57 = scmp.ne.s32.totalorder %s40, %s56
    %p58 = scmp.eq.s32.totalorder %s18, 0
    %p59 = por %p57, %p58
    %s60 = ssub.s32 %s19, %s31
    %s61 = ssub.s32 %s20, %s27
    %s62 = sor.u32 %s60, %s61
    %p63 = scmp.eq.s32.totalorder %s62, 0
    %s65 = sadd.s32 %s64, 1
    %s66 = scalar_select %p63, %s64, %s65
    %p69 = pneg %p63
    %p70 = scmp.eq.s32.totalorder %s12, 1
    %p71 = por %p69, %p70
    %p72 = scmp.ne.s32.totalorder %s64, %s67
    %p73 = scmp.eq.s32.totalorder %s12, 0
    %p74 = por %p72, %p73
    %p75 = scmp.ne.s32.totalorder %s64, %s67
    %p76 = scmp.eq.s32.totalorder %s17, 1
    %p77 = por %p75, %p76
    %p78 = scmp.ne.s32.totalorder %s67, %s68
    %p79 = scmp.eq.s32.totalorder %s17, 0
    %p80 = por %p78, %p79
    %p81 = scmp.ne.s32.totalorder %s67, %s68
    %p82 = scmp.eq.s32.totalorder %s18, 1
    %p83 = por %p81, %p82
    %p85 = scmp.ne.s32.totalorder %s68, %s84
    %p86 = scmp.eq.s32.totalorder %s18, 0
    %p87 = por %p85, %p86
    %s88 = ssub.s32 %s19, %s31
    %s89 = ssub.s32 %s20, %s27
    %s90 = sor.u32 %s88, %s89
    %p91 = scmp.eq.s32.totalorder %s90, 0
    %s93 = sadd.s32 %s92, 1
    %s94 = scalar_select %p91, %s92, %s93
    %p97 = pneg %p91
    %p98 = scmp.eq.s32.totalorder %s12, 1
    %p99 = por %p97, %p98
    %p100 = scmp.ne.s32.totalorder %s92, %s95
    %p101 = scmp.eq.s32.totalorder %s12, 0
    %p102 = por %p100, %p101
    %p103 = scmp.ne.s32.totalorder %s92, %s95
    %p104 = scmp.eq.s32.totalorder %s17, 1
    %p105 = por %p103, %p104
    %p106 = scmp.ne.s32.totalorder %s95, %s96
    %p107 = scmp.eq.s32.totalorder %s17, 0
    %p108 = por %p106, %p107
    %p109 = scmp.ne.s32.totalorder %s95, %s96
    %p110 = scmp.eq.s32.totalorder %s18, 1
    %p111 = por %p109, %p110
    %p113 = scmp.ne.s32.totalorder %s96, %s112
    %p114 = scmp.eq.s32.totalorder %s18, 0
    %p115 = por %p113, %p114
    %s116 = ssub.s32 %s19, %s31
    %s117 = ssub.s32 %s20, %s27
    %s118 = sor.u32 %s116, %s117
    %p119 = scmp.eq.s32.totalorder %s118, 0
    %s121 = sadd.s32 %s120, 1
    %s122 = scalar_select %p119, %s120, %s121
    %p125 = pneg %p119
    %p126 = scmp.eq.s32.totalorder %s12, 1
    %p127 = por %p125, %p126
    %p128 = scmp.ne.s32.totalorder %s120, %s123
    %p129 = scmp.eq.s32.totalorder %s12, 0
    %p130 = por %p128, %p129
    %p131 = scmp.ne.s32.totalorder %s120, %s123
    %p132 = scmp.eq.s32.totalorder %s17, 1
    %p133 = por %p131, %p132
    %p134 = scmp.ne.s32.totalorder %s123, %s124
    %p135 = scmp.eq.s32.totalorder %s17, 0
    %p136 = por %p134, %p135
    %p137 = scmp.ne.s32.totalorder %s123, %s124
    %p138 = scmp.eq.s32.totalorder %s18, 1
    %p139 = por %p137, %p138
    %p141 = scmp.ne.s32.totalorder %s124, %s140
    %p142 = scmp.eq.s32.totalorder %s18, 0
    %p143 = por %p141, %p142
    %s144 = ssub.s32 %s19, %s31
    %s145 = ssub.s32 %s20, %s27
    %s146 = sor.u32 %s144, %s145
    %p147 = scmp.eq.s32.totalorder %s146, 0
    %s149 = sadd.s32 %s148, 1
    %s150 = scalar_select %p147, %s148, %s149
    %p153 = pneg %p147
    %p154 = scmp.eq.s32.totalorder %s12, 1
    %p155 = por %p153, %p154
    %p156 = scmp.ne.s32.totalorder %s148, %s151
    %p157 = scmp.eq.s32.totalorder %s12, 0
    %p158 = por %p156, %p157
    %p159 = scmp.ne.s32.totalorder %s148, %s151
    %p160 = scmp.eq.s32.totalorder %s17, 1
    %p161 = por %p159, %p160
    %p162 = scmp.ne.s32.totalorder %s151, %s152
    %p163 = scmp.eq.s32.totalorder %s17, 0
    %p164 = por %p162, %p163
    %p165 = scmp.ne.s32.totalorder %s151, %s152
    %p166 = scmp.eq.s32.totalorder %s18, 1
    %p167 = por %p165, %p166
    %p169 = scmp.ne.s32.totalorder %s152, %s168
    %p170 = scmp.eq.s32.totalorder %s18, 0
    %p171 = por %p169, %p170
    %s172 = ssub.s32 %s19, %s31
    %s173 = ssub.s32 %s20, %s27
    %s174 = sor.u32 %s172, %s173
    %p175 = scmp.eq.s32.totalorder %s174, 0
    %s177 = sadd.s32 %s176, 1
    %s178 = scalar_select %p175, %s176, %s177
    %p181 = pneg %p175
    %p182 = scmp.eq.s32.totalorder %s12, 1
    %p183 = por %p181, %p182
    %p184 = scmp.ne.s32.totalorder %s176, %s179
    %p185 = scmp.eq.s32.totalorder %s12, 0
    %p186 = por %p184, %p185
    %p187 = scmp.ne.s32.totalorder %s176, %s179
    %p188 = scmp.eq.s32.totalorder %s17, 1
    %p189 = por %p187, %p188
    %p190 = scmp.ne.s32.totalorder %s179, %s180
    %p191 = scmp.eq.s32.totalorder %s17, 0
    %p192 = por %p190, %p191
    %p193 = scmp.ne.s32.totalorder %s179, %s180
    %p194 = scmp.eq.s32.totalorder %s18, 1
    %p195 = por %p193, %p194
    %p197 = scmp.ne.s32.totalorder %s180, %s196
    %p198 = scmp.eq.s32.totalorder %s18, 0
    %p199 = por %p197, %p198
    %p200 = scmp.le.s32.totalorder 1, %s12
    %p201 = scmp.lt.s32.totalorder %s12, 3
    %p202 = pnand %p200, %p201
    %p203 = pneg %p202
    // Predicated region
    $region9: #{photometric_loss.1} parent=5 // pred_check
      _
    $region10: #{photometric_loss.1} parent=5 // pred_check_branch
      %205 = sbr.rel (%p202) target = $region12
    $region11: #{photometric_loss.1} parent=5 // pred_region
      %s206 = ssub.s32 %s12, 1
    $region12: #{photometric_loss.1} parent=5 // pred_fallthru
      _
    %p207 = scmp.lt.s32.totalorder %s12, 2
    // Predicated region
    $region13: #{photometric_loss.1} parent=5 // pred_check
      %p208 = pneg %p207
    $region14: #{photometric_loss.1} parent=5 // pred_check_branch
      %210 = sbr.rel (%p208) target = $region16
    $region15: #{photometric_loss.1} parent=5 // pred_region
      // Predicated region
      $region17: #{photometric_loss.1} parent=15 // pred_check
        %p211 = pneg %p46
      $region18: #{photometric_loss.1} parent=15 // pred_check_branch
        %213 = sbr.rel (%p211) target = $region20
      $region19: #{photometric_loss.1} parent=15 // pred_region
        %s214 = smul.u32 2, %s20
        %p215 = scmp.lt.s32.totalorder %s19, 1
        %s216 = scalar_select %p215, %s19, 1
        %p217 = scmp.lt.s32.totalorder %s214, 1
        %s218 = scalar_select %p217, %s214, 1
        %s219 = smul.addr %s216, 6
        %s220 = sadd.s32 %s218, %s219
        %s221 = smul.addr %s220, 8
        %s222 = scalar_lea.vmem %s0, %s221
        %s223 = smul.u32 2, %s20
      $region20: #{photometric_loss.1} parent=15 // pred_fallthru
        _
      // Predicated region
      $region21: #{photometric_loss.1} parent=15 // pred_check
        %p224 = pneg %p74
      $region22: #{photometric_loss.1} parent=15 // pred_check_branch
        %226 = sbr.rel (%p224) target = $region24
      $region23: #{photometric_loss.1} parent=15 // pred_region
        %s227 = smul.u32 2, %s20
        %p228 = scmp.lt.s32.totalorder %s19, 1
        %s229 = scalar_select %p228, %s19, 1
        %p230 = scmp.lt.s32.totalorder %s227, 1
        %s231 = scalar_select %p230, %s227, 1
        %s232 = smul.addr %s229, 6
        %s233 = sadd.s32 %s231, %s232
        %s234 = smul.addr %s233, 8
        %s235 = scalar_lea.vmem %s1, %s234
        %s236 = smul.u32 2, %s20
      $region24: #{photometric_loss.1} parent=15 // pred_fallthru
        _
      // Predicated region
      $region25: #{photometric_loss.1} parent=15 // pred_check
        %p237 = pneg %p102
      $region26: #{photometric_loss.1} parent=15 // pred_check_branch
        %239 = sbr.rel (%p237) target = $region28
      $region27: #{photometric_loss.1} parent=15 // pred_region
        %p240 = scmp.lt.s32.totalorder %s19, 1
        %s241 = scalar_select %p240, %s19, 1
        %p242 = scmp.lt.s32.totalorder %s20, 0
        %s243 = scalar_select %p242, %s20, 0
        %s244 = smul.addr %s243, 3
        %s245 = smul.addr %s241, 3
        %s246 = sadd.s32 %s244, %s245
        %s247 = smul.addr %s246, 2
        %s248 = scalar_lea.vmem %s2, %s247
      $region28: #{photometric_loss.1} parent=15 // pred_fallthru
        _
      // Predicated region
      $region29: #{photometric_loss.1} parent=15 // pred_check
        %p249 = pneg %p130
      $region30: #{photometric_loss.1} parent=15 // pred_check_branch
        %251 = sbr.rel (%p249) target = $region32
      $region31: #{photometric_loss.1} parent=15 // pred_region
        %p252 = scmp.lt.s32.totalorder %s19, 1
        %s253 = scalar_select %p252, %s19, 1
        %p254 = scmp.lt.s32.totalorder %s20, 0
        %s255 = scalar_select %p254, %s20, 0
        %s256 = smul.addr %s255, 3
        %s257 = smul.addr %s253, 3
        %s258 = sadd.s32 %s256, %s257
        %s259 = smul.addr %s258, 2
        %s260 = scalar_lea.vmem %s3, %s259
      $region32: #{photometric_loss.1} parent=15 // pred_fallthru
        _
    $region16: #{photometric_loss.1} parent=5 // pred_fallthru
      _
    %p261 = scmp.le.s32.totalorder 1, %s12
    %p262 = scmp.lt.s32.totalorder %s12, 3
    %p263 = pnand %p261, %p262
    %p264 = pneg %p263
    // Predicated region
    $region33: #{photometric_loss.1} parent=5 // pred_check
      _
    $region34: #{photometric_loss.1} parent=5 // pred_check_branch
      %266 = sbr.rel (%p263) target = $region36
    $region35: #{photometric_loss.1} parent=5 // pred_region
      %s267 = ssub.s32 %s12, 1
      %s268 = smul.u32 2, %s22
      %p269 = scmp.lt.s32.totalorder %s21, 1
      %s270 = scalar_select %p269, %s21, 1
      %p271 = scmp.lt.s32.totalorder %s268, 1
      %s272 = scalar_select %p271, %s268, 1
      %s273 = smul.addr %s270, 6
      %s274 = sadd.s32 %s272, %s273
      %s275 = smul.addr %s274, 8
      %s276 = scalar_lea.vmem %s0, %s275
      %p277 = pneg %p52
      %p278 = pneg %p49
      %s279 = smul.u32 2, %s22
      %p280 = scmp.lt.s32.totalorder %s21, 1
      %s281 = scalar_select %p280, %s21, 1
      %p282 = scmp.lt.s32.totalorder %s279, 1
      %s283 = scalar_select %p282, %s279, 1
      %s284 = smul.addr %s281, 6
      %s285 = sadd.s32 %s283, %s284
      %s286 = smul.addr %s285, 8
      %s287 = scalar_lea.vmem %s1, %s286
      %p288 = pneg %p80
      %p289 = pneg %p77
      %p290 = scmp.lt.s32.totalorder %s21, 1
      %s291 = scalar_select %p290, %s21, 1
      %p292 = scmp.lt.s32.totalorder %s22, 0
      %s293 = scalar_select %p292, %s22, 0
      %s294 = smul.addr %s293, 3
      %s295 = smul.addr %s291, 3
      %s296 = sadd.s32 %s294, %s295
      %s297 = smul.addr %s296, 2
      %s298 = scalar_lea.vmem %s2, %s297
      %p299 = pneg %p108
      %p300 = pneg %p105
      %p301 = scmp.lt.s32.totalorder %s21, 1
      %s302 = scalar_select %p301, %s21, 1
      %p303 = scmp.lt.s32.totalorder %s22, 0
      %s304 = scalar_select %p303, %s22, 0
      %s305 = smul.addr %s304, 3
      %s306 = smul.addr %s302, 3
      %s307 = sadd.s32 %s305, %s306
      %s308 = smul.addr %s307, 2
      %s309 = scalar_lea.vmem %s3, %s308
      %p310 = pneg %p136
      %p311 = pneg %p133
      %p312 = pneg %p164
      %p313 = pneg %p161
      %s314 = smul.u32 2, %s22
      %p315 = scmp.lt.s32.totalorder %s21, 1
      %s316 = scalar_select %p315, %s21, 1
      %p317 = scmp.lt.s32.totalorder %s314, 1
      %s318 = scalar_select %p317, %s314, 1
      %s319 = smul.addr %s316, 2
      %s320 = sadd.s32 %s318, %s319
      %s321 = smul.addr %s320, 8
      %s322 = scalar_lea.vmem %s4, %s321
      %p323 = pneg %p192
      %p324 = pneg %p189
      %p325 = scmp.lt.s32.totalorder %s21, 1
      %s326 = scalar_select %p325, %s21, 1
      %p327 = scmp.lt.s32.totalorder %s22, 0
      %s328 = scalar_select %p327, %s22, 0
      %s329 = sadd.s32 %s328, %s326
      %s330 = scalar_lea.vmem %s5, %s329
      %s331 = smul.u32 2, %s22
      %p332 = scmp.lt.s32.totalorder %s21, 1
      %s333 = scalar_select %p332, %s21, 1
      %p334 = scmp.lt.s32.totalorder %s331, 1
      %s335 = scalar_select %p334, %s331, 1
      %s336 = smul.addr %s333, 6
      %s337 = sadd.s32 %s335, %s336
      %s338 = smul.addr %s337, 8
      %s339 = scalar_lea.vmem %s0, %s338
      %s340 = smul.u32 2, %s22
      %s341 = smul.u32 2, %s22
      %p342 = scmp.lt.s32.totalorder %s21, 1
      %s343 = scalar_select %p342, %s21, 1
      %p344 = scmp.lt.s32.totalorder %s341, 1
      %s345 = scalar_select %p344, %s341, 1
      %s346 = smul.addr %s343, 6
      %s347 = sadd.s32 %s345, %s346
      %s348 = smul.addr %s347, 8
      %s349 = scalar_lea.vmem %s1, %s348
      %s350 = smul.u32 2, %s22
      %p351 = scmp.lt.s32.totalorder %s21, 1
      %s352 = scalar_select %p351, %s21, 1
      %p353 = scmp.lt.s32.totalorder %s22, 0
      %s354 = scalar_select %p353, %s22, 0
      %s355 = smul.addr %s354, 3
      %s356 = smul.addr %s352, 3
      %s357 = sadd.s32 %s355, %s356
      %s358 = smul.addr %s357, 2
      %s359 = scalar_lea.vmem %s2, %s358
      %p360 = scmp.lt.s32.totalorder %s21, 1
      %s361 = scalar_select %p360, %s21, 1
      %p362 = scmp.lt.s32.totalorder %s22, 0
      %s363 = scalar_select %p362, %s22, 0
      %s364 = smul.addr %s363, 3
      %s365 = smul.addr %s361, 3
      %s366 = sadd.s32 %s364, %s365
      %s367 = smul.addr %s366, 2
      %s368 = scalar_lea.vmem %s3, %s367
      %s369 = smul.u32 2, %s22
      %p370 = scmp.lt.s32.totalorder %s21, 1
      %s371 = scalar_select %p370, %s21, 1
      %p372 = scmp.lt.s32.totalorder %s369, 1
      %s373 = scalar_select %p372, %s369, 1
      %s374 = smul.addr %s371, 2
      %s375 = sadd.s32 %s373, %s374
      %s376 = smul.addr %s375, 8
      %s377 = scalar_lea.vmem %s4, %s376
      %s378 = smul.u32 2, %s22
      %p379 = scmp.lt.s32.totalorder %s21, 1
      %s380 = scalar_select %p379, %s21, 1
      %p381 = scmp.lt.s32.totalorder %s22, 0
      %s382 = scalar_select %p381, %s22, 0
      %s383 = sadd.s32 %s382, %s380
      %s384 = scalar_lea.vmem %s5, %s383
      %v385 = vlaneseq
      %v386 = vshrl.u32 %v385, 7
      %v387 = vadd.s32 %v386, 8
      %v388 = vlaneseq
      %v389 = vand.u32 %v388, 127
      %vm390 = vcmp.eq.s32.totalorder %v386, 0
      %vm391 = vcmp.eq.s32.totalorder %v387, 0
      %vm392 = vcmp.eq.s32.totalorder %v386, 15
      %vm393 = vcmp.eq.s32.totalorder %v387, 15
      %vm394 = vcmp.eq.s32.totalorder %v389, 0
      %vm395 = vcmp.eq.s32.totalorder %v389, 15
      %v396 = vld [vmem:[%s339] sm:$0xff]
      %v397 = vld [vmem:[%s339 + $0x8] sm:$0xff]
      %v398 = vld [vmem:[%s349] sm:$0xff]
      %v399 = vld [vmem:[%s349 + $0x8] sm:$0xff]
      %v400 = vld [vmem:[%s359] sm:$0x3]
      %v401 = vld [vmem:[%s368] sm:$0x3]
      %v402 = vrot.slane %v396, 7
      %v403 = vrot.slane %v397, 7
      %vm404 = vcmp.lt.s32.totalorder %v386, 1
      %v405 = vsel %vm404, %v402, %v403
      %v406 = vsel %vm404, %v403, %v402
      %v407 = vrot.slane %v396, 1
      %v408 = vrot.slane %v397, 1
      %vm409 = vcmp.lt.s32.totalorder %v386, 7
      %v410 = vsel %vm409, %v407, %v408
      %v411 = vsel %vm409, %v408, %v407
      %v412 = vlaneseq
      %v413 = vshrl.u32 %v412, 7
      %v414 = vsub.s32 0, %v413
      %v415 = vrot.slane %v400, %v414
      %v416 = vsel %vm390, %v415, %v406
      %v417 = vsel %vm391, %v415, %v405
      %v418 = vlaneseq
      %v419 = vshrl.u32 %v418, 7
      %v420 = vsub.s32 1, %v419
      %v421 = vrot.slane %v400, %v420
      %v422 = vsel %vm392, %v421, %v410
      %v423 = vsel %vm393, %v421, %v411
      %v424 = vadd.f32 %v416, %v396
      %v425 = vadd.f32 %v417, %v397
      %v426 = vadd.f32 %v424, %v422
      %v427 = vadd.f32 %v425, %v423
      %428 = vrot.lane.b32.xlu0 %v426, 1
      %v429 = vpop.permute.xlu0 %428
      %430 = vrot.lane.b32.xlu0 %v427, 1
      %v431 = vpop.permute.xlu0 %430
      %432 = vrot.lane.b32.xlu0 %v426, 127
      %v433 = vpop.permute.xlu0 %432
      %434 = vrot.lane.b32.xlu0 %v427, 127
      %v435 = vpop.permute.xlu0 %434
      %v436 = vsel %vm394, %v433, %v429
      %v437 = vsel %vm394, %v435, %v431
      %v438 = vsel %vm395, %v429, %v433
      %v439 = vsel %vm395, %v431, %v435
      %v440 = vadd.f32 %v436, %v426
      %v441 = vadd.f32 %v437, %v427
      %v442 = vadd.f32 %v440, %v438
      %v443 = vadd.f32 %v441, %v439
      %v444 = vrot.slane %v398, 7
      %v445 = vrot.slane %v399, 7
      %v446 = vsel %vm404, %v444, %v445
      %v447 = vsel %vm404, %v445, %v444
      %v448 = vrot.slane %v398, 1
      %v449 = vrot.slane %v399, 1
      %v450 = vsel %vm409, %v448, %v449
      %v451 = vsel %vm409, %v449, %v448
      %v452 = vlaneseq
      %v453 = vshrl.u32 %v452, 7
      %v454 = vsub.s32 0, %v453
      %v455 = vrot.slane %v401, %v454
      %v456 = vsel %vm390, %v455, %v447
      %v457 = vsel %vm391, %v455, %v446
      %v458 = vlaneseq
      %v459 = vshrl.u32 %v458, 7
      %v460 = vsub.s32 1, %v459
      %v461 = vrot.slane %v401, %v460
      %v462 = vsel %vm392, %v461, %v450
      %v463 = vsel %vm393, %v461, %v451
      %v464 = vadd.f32 %v456, %v398
      %v465 = vadd.f32 %v457, %v399
      %v466 = vadd.f32 %v464, %v462
      %v467 = vadd.f32 %v465, %v463
      %468 = vrot.lane.b32.xlu0 %v466, 1
      %v469 = vpop.permute.xlu0 %468
      %470 = vrot.lane.b32.xlu0 %v467, 1
      %v471 = vpop.permute.xlu0 %470
      %472 = vrot.lane.b32.xlu0 %v466, 127
      %v473 = vpop.permute.xlu0 %472
      %474 = vrot.lane.b32.xlu0 %v467, 127
      %v475 = vpop.permute.xlu0 %474
      %v476 = vsel %vm394, %v473, %v469
      %v477 = vsel %vm394, %v475, %v471
      %v478 = vsel %vm395, %v469, %v473
      %v479 = vsel %vm395, %v471, %v475
      %v480 = vadd.f32 %v476, %v466
      %v481 = vadd.f32 %v477, %v467
      %v482 = vadd.f32 %v480, %v478
      %v483 = vadd.f32 %v481, %v479
      %v484 = vmul.f32 %v396, %v398
      %v485 = vmul.f32 %v397, %v399
      %v486 = vmul.f32 %v400, %v401
      %v487 = vrot.slane %v484, 7
      %v488 = vrot.slane %v485, 7
      %v489 = vsel %vm404, %v487, %v488
      %v490 = vsel %vm404, %v488, %v487
      %v491 = vrot.slane %v484, 1
      %v492 = vrot.slane %v485, 1
      %v493 = vsel %vm409, %v491, %v492
      %v494 = vsel %vm409, %v492, %v491
      %v495 = vlaneseq
      %v496 = vshrl.u32 %v495, 7
      %v497 = vsub.s32 0, %v496
      %v498 = vrot.slane %v486, %v497
      %v499 = vsel %vm390, %v498, %v490
      %v500 = vsel %vm391, %v498, %v489
      %v501 = vlaneseq
      %v502 = vshrl.u32 %v501, 7
      %v503 = vsub.s32 1, %v502
      %v504 = vrot.slane %v486, %v503
      %v505 = vsel %vm392, %v504, %v493
      %v506 = vsel %vm393, %v504, %v494
      %v507 = vadd.f32 %v499, %v484
      %v508 = vadd.f32 %v500, %v485
      %v509 = vadd.f32 %v507, %v505
      %v510 = vadd.f32 %v508, %v506
      %511 = vrot.lane.b32.xlu0 %v509, 1
      %v512 = vpop.permute.xlu0 %511
      %513 = vrot.lane.b32.xlu0 %v510, 1
      %v514 = vpop.permute.xlu0 %513
      %515 = vrot.lane.b32.xlu0 %v509, 127
      %v516 = vpop.permute.xlu0 %515
      %517 = vrot.lane.b32.xlu0 %v510, 127
      %v518 = vpop.permute.xlu0 %517
      %v519 = vsel %vm394, %v516, %v512
      %v520 = vsel %vm394, %v518, %v514
      %v521 = vsel %vm395, %v512, %v516
      %v522 = vsel %vm395, %v514, %v518
      %v523 = vadd.f32 %v519, %v509
      %v524 = vadd.f32 %v520, %v510
      %v525 = vadd.f32 %v523, %v521
      %v526 = vadd.f32 %v524, %v522
      %v527 = vmul.f32 %v396, %v396
      %v528 = vmul.f32 %v397, %v397
      %v529 = vmul.f32 %v400, %v400
      %v530 = vrot.slane %v527, 7
      %v531 = vrot.slane %v528, 7
      %v532 = vsel %vm404, %v530, %v531
      %v533 = vsel %vm404, %v531, %v530
      %v534 = vrot.slane %v527, 1
      %v535 = vrot.slane %v528, 1
      %v536 = vsel %vm409, %v534, %v535
      %v537 = vsel %vm409, %v535, %v534
      %v538 = vlaneseq
      %v539 = vshrl.u32 %v538, 7
      %v540 = vsub.s32 0, %v539
      %v541 = vrot.slane %v529, %v540
      %v542 = vsel %vm390, %v541, %v533
      %v543 = vsel %vm391, %v541, %v532
      %v544 = vlaneseq
      %v545 = vshrl.u32 %v544, 7
      %v546 = vsub.s32 1, %v545
      %v547 = vrot.slane %v529, %v546
      %v548 = vsel %vm392, %v547, %v536
      %v549 = vsel %vm393, %v547, %v537
      %v550 = vadd.f32 %v542, %v527
      %v551 = vadd.f32 %v543, %v528
      %v552 = vadd.f32 %v550, %v548
      %v553 = vadd.f32 %v551, %v549
      %554 = vrot.lane.b32.xlu0 %v552, 1
      %v555 = vpop.permute.xlu0 %554
      %556 = vrot.lane.b32.xlu0 %v553, 1
      %v557 = vpop.permute.xlu0 %556
      %558 = vrot.lane.b32.xlu0 %v552, 127
      %v559 = vpop.permute.xlu0 %558
      %560 = vrot.lane.b32.xlu0 %v553, 127
      %v561 = vpop.permute.xlu0 %560
      %v562 = vsel %vm394, %v559, %v555
      %v563 = vsel %vm394, %v561, %v557
      %v564 = vsel %vm395, %v555, %v559
      %v565 = vsel %vm395, %v557, %v561
      %v566 = vadd.f32 %v562, %v552
      %v567 = vadd.f32 %v563, %v553
      %v568 = vadd.f32 %v566, %v564
      %v569 = vadd.f32 %v567, %v565
      %v570 = vmul.f32 %v398, %v398
      %v571 = vmul.f32 %v399, %v399
      %v572 = vmul.f32 %v401, %v401
      %v573 = vrot.slane %v570, 7
      %v574 = vrot.slane %v571, 7
      %v575 = vsel %vm404, %v573, %v574
      %v576 = vsel %vm404, %v574, %v573
      %v577 = vrot.slane %v570, 1
      %v578 = vrot.slane %v571, 1
      %v579 = vsel %vm409, %v577, %v578
      %v580 = vsel %vm409, %v578, %v577
      %v581 = vlaneseq
      %v582 = vshrl.u32 %v581, 7
      %v583 = vsub.s32 0, %v582
      %v584 = vrot.slane %v572, %v583
      %v585 = vsel %vm390, %v584, %v576
      %v586 = vsel %vm391, %v584, %v575
      %v587 = vlaneseq
      %v588 = vshrl.u32 %v587, 7
      %v589 = vsub.s32 1, %v588
      %v590 = vrot.slane %v572, %v589
      %v591 = vsel %vm392, %v590, %v579
      %v592 = vsel %vm393, %v590, %v580
      %v593 = vadd.f32 %v585, %v570
      %v594 = vadd.f32 %v586, %v571
      %v595 = vadd.f32 %v593, %v591
      %v596 = vadd.f32 %v594, %v592
      %597 = vrot.lane.b32.xlu0 %v595, 1
      %v598 = vpop.permute.xlu0 %597
      %599 = vrot.lane.b32.xlu0 %v596, 1
      %v600 = vpop.permute.xlu0 %599
      %601 = vrot.lane.b32.xlu0 %v595, 127
      %v602 = vpop.permute.xlu0 %601
      %603 = vrot.lane.b32.xlu0 %v596, 127
      %v604 = vpop.permute.xlu0 %603
      %v605 = vsel %vm394, %v602, %v598
      %v606 = vsel %vm394, %v604, %v600
      %v607 = vsel %vm395, %v598, %v602
      %v608 = vsel %vm395, %v600, %v604
      %v609 = vadd.f32 %v605, %v595
      %v610 = vadd.f32 %v606, %v596
      %v611 = vadd.f32 %v609, %v607
      %v612 = vadd.f32 %v610, %v608
      %v613 = vmul.f32 %v442, %v442
      %v614 = vmul.f32 %v443, %v443
      %v615 = vmul.f32 %v482, %v482
      %v616 = vmul.f32 %v483, %v483
      %v617 = vmul.f32 %v442, %v482
      %v618 = vmul.f32 %v443, %v483
      %v619 = vmul.f32 %v525, 9.0
      %v620 = vmul.f32 %v526, 9.0
      %v621 = vsub.f32 %v619, %v617
      %v622 = vsub.f32 %v620, %v618
      %v623 = vmul.f32 %v568, 9.0
      %v624 = vmul.f32 %v569, 9.0
      %v625 = vsub.f32 %v623, %v613
      %v626 = vsub.f32 %v624, %v614
      %v627 = vmul.f32 %v611, 9.0
      %v628 = vmul.f32 %v612, 9.0
      %v629 = vsub.f32 %v627, %v615
      %v630 = vsub.f32 %v628, %v616
      %v631 = vmul.f32 %v617, 2.0
      %v632 = vmul.f32 %v618, 2.0
      %v633 = vadd.f32 %v631, 0.0081
      %v634 = vadd.f32 %v632, 0.0081
      %v635 = vmul.f32 %v621, 2.0
      %v636 = vmul.f32 %v622, 2.0
      %v637 = vadd.f32 %v635, 0.0729
      %v638 = vadd.f32 %v636, 0.0729
      %v639 = vmul.f32 %v633, %v637
      %v640 = vmul.f32 %v634, %v638
      %v641 = vadd.f32 %v613, %v615
      %v642 = vadd.f32 %v614, %v616
      %v643 = vadd.f32 %v641, 0.0081
      %v644 = vadd.f32 %v642, 0.0081
      %v645 = vadd.f32 %v625, %v629
      %v646 = vadd.f32 %v626, %v630
      %v647 = vadd.f32 %v645, 0.0729
      %v648 = vadd.f32 %v646, 0.0729
      %v649 = vmul.f32 %v643, %v647
      %v650 = vmul.f32 %v644, %v648
      %v651 = vrcp.pop %v649
      %v652 = vrcp.pop %v650
      %v653 = vmul.f32 %v639, %v651
      %v654 = vmul.f32 %v640, %v652
      %v655 = vsub.f32 1.0, %v653
      %v656 = vsub.f32 1.0, %v654
      %v657 = vmul.f32 %v655, 0.5
      %v658 = vmul.f32 %v656, 0.5
      %v659 = vmax.f32 %v657, 0.0
      %v660 = vmax.f32 %v658, 0.0
      %v661 = vmin.f32 %v659, 1.0
      %v662 = vmin.f32 %v660, 1.0
      %v663 = vadd.f32 %v661, 0.0
      %v664 = vadd.f32 %v662, 0.0
      %v665 = vsub.f32 %v396, %v398
      %v666 = vsub.f32 %v397, %v399
      %v667 = vand.u32 2147483647, %v665
      %v668 = vand.u32 2147483647, %v666
      %v669 = vadd.f32 %v667, 0.0
      %v670 = vadd.f32 %v668, 0.0
      %s671 = scalar_lea.vmem %s339, 16
      %v672 = vld [vmem:[%s671] sm:$0xff]
      %v673 = vld [vmem:[%s671 + $0x8] sm:$0xff]
      %s674 = scalar_lea.vmem %s349, 16
      %v675 = vld [vmem:[%s674] sm:$0xff]
      %v676 = vld [vmem:[%s674 + $0x8] sm:$0xff]
      %s677 = scalar_lea.vmem %s359, 2
      %v678 = vld [vmem:[%s677] sm:$0x3]
      %s679 = scalar_lea.vmem %s368, 2
      %v680 = vld [vmem:[%s679] sm:$0x3]
      %v681 = vrot.slane %v672, 7
      %v682 = vrot.slane %v673, 7
      %v683 = vsel %vm404, %v681, %v682
      %v684 = vsel %vm404, %v682, %v681
      %v685 = vrot.slane %v672, 1
      %v686 = vrot.slane %v673, 1
      %v687 = vsel %vm409, %v685, %v686
      %v688 = vsel %vm409, %v686, %v685
      %v689 = vlaneseq
      %v690 = vshrl.u32 %v689, 7
      %v691 = vsub.s32 0, %v690
      %v692 = vrot.slane %v678, %v691
      %v693 = vsel %vm390, %v692, %v684
      %v694 = vsel %vm391, %v692, %v683
      %v695 = vlaneseq
      %v696 = vshrl.u32 %v695, 7
      %v697 = vsub.s32 1, %v696
      %v698 = vrot.slane %v678, %v697
      %v699 = vsel %vm392, %v698, %v687
      %v700 = vsel %vm393, %v698, %v688
      %v701 = vadd.f32 %v693, %v672
      %v702 = vadd.f32 %v694, %v673
      %v703 = vadd.f32 %v701, %v699
      %v704 = vadd.f32 %v702, %v700
      %705 = vrot.lane.b32.xlu0 %v703, 1
      %v706 = vpop.permute.xlu0 %705
      %707 = vrot.lane.b32.xlu0 %v704, 1
      %v708 = vpop.permute.xlu0 %707
      %709 = vrot.lane.b32.xlu0 %v703, 127
      %v710 = vpop.permute.xlu0 %709
      %711 = vrot.lane.b32.xlu0 %v704, 127
      %v712 = vpop.permute.xlu0 %711
      %v713 = vsel %vm394, %v710, %v706
      %v714 = vsel %vm394, %v712, %v708
      %v715 = vsel %vm395, %v706, %v710
      %v716 = vsel %vm395, %v708, %v712
      %v717 = vadd.f32 %v713, %v703
      %v718 = vadd.f32 %v714, %v704
      %v719 = vadd.f32 %v717, %v715
      %v720 = vadd.f32 %v718, %v716
      %v721 = vrot.slane %v675, 7
      %v722 = vrot.slane %v676, 7
      %v723 = vsel %vm404, %v721, %v722
      %v724 = vsel %vm404, %v722, %v721
      %v725 = vrot.slane %v675, 1
      %v726 = vrot.slane %v676, 1
      %v727 = vsel %vm409, %v725, %v726
      %v728 = vsel %vm409, %v726, %v725
      %v729 = vlaneseq
      %v730 = vshrl.u32 %v729, 7
      %v731 = vsub.s32 0, %v730
      %v732 = vrot.slane %v680, %v731
      %v733 = vsel %vm390, %v732, %v724
      %v734 = vsel %vm391, %v732, %v723
      %v735 = vlaneseq
      %v736 = vshrl.u32 %v735, 7
      %v737 = vsub.s32 1, %v736
      %v738 = vrot.slane %v680, %v737
      %v739 = vsel %vm392, %v738, %v727
      %v740 = vsel %vm393, %v738, %v728
      %v741 = vadd.f32 %v733, %v675
      %v742 = vadd.f32 %v734, %v676
      %v743 = vadd.f32 %v741, %v739
      %v744 = vadd.f32 %v742, %v740
      %745 = vrot.lane.b32.xlu0 %v743, 1
      %v746 = vpop.permute.xlu0 %745
      %747 = vrot.lane.b32.xlu0 %v744, 1
      %v748 = vpop.permute.xlu0 %747
      %749 = vrot.lane.b32.xlu0 %v743, 127
      %v750 = vpop.permute.xlu0 %749
      %751 = vrot.lane.b32.xlu0 %v744, 127
      %v752 = vpop.permute.xlu0 %751
      %v753 = vsel %vm394, %v750, %v746
      %v754 = vsel %vm394, %v752, %v748
      %v755 = vsel %vm395, %v746, %v750
      %v756 = vsel %vm395, %v748, %v752
      %v757 = vadd.f32 %v753, %v743
      %v758 = vadd.f32 %v754, %v744
      %v759 = vadd.f32 %v757, %v755
      %v760 = vadd.f32 %v758, %v756
      %v761 = vmul.f32 %v672, %v675
      %v762 = vmul.f32 %v673, %v676
      %v763 = vmul.f32 %v678, %v680
      %v764 = vrot.slane %v761, 7
      %v765 = vrot.slane %v762, 7
      %v766 = vsel %vm404, %v764, %v765
      %v767 = vsel %vm404, %v765, %v764
      %v768 = vrot.slane %v761, 1
      %v769 = vrot.slane %v762, 1
      %v770 = vsel %vm409, %v768, %v769
      %v771 = vsel %vm409, %v769, %v768
      %v772 = vlaneseq
      %v773 = vshrl.u32 %v772, 7
      %v774 = vsub.s32 0, %v773
      %v775 = vrot.slane %v763, %v774
      %v776 = vsel %vm390, %v775, %v767
      %v777 = vsel %vm391, %v775, %v766
      %v778 = vlaneseq
      %v779 = vshrl.u32 %v778, 7
      %v780 = vsub.s32 1, %v779
      %v781 = vrot.slane %v763, %v780
      %v782 = vsel %vm392, %v781, %v770
      %v783 = vsel %vm393, %v781, %v771
      %v784 = vadd.f32 %v776, %v761
      %v785 = vadd.f32 %v777, %v762
      %v786 = vadd.f32 %v784, %v782
      %v787 = vadd.f32 %v785, %v783
      %788 = vrot.lane.b32.xlu0 %v786, 1
      %v789 = vpop.permute.xlu0 %788
      %790 = vrot.lane.b32.xlu0 %v787, 1
      %v791 = vpop.permute.xlu0 %790
      %792 = vrot.lane.b32.xlu0 %v786, 127
      %v793 = vpop.permute.xlu0 %792
      %794 = vrot.lane.b32.xlu0 %v787, 127
      %v795 = vpop.permute.xlu0 %794
      %v796 = vsel %vm394, %v793, %v789
      %v797 = vsel %vm394, %v795, %v791
      %v798 = vsel %vm395, %v789, %v793
      %v799 = vsel %vm395, %v791, %v795
      %v800 = vadd.f32 %v796, %v786
      %v801 = vadd.f32 %v797, %v787
      %v802 = vadd.f32 %v800, %v798
      %v803 = vadd.f32 %v801, %v799
      %v804 = vmul.f32 %v672, %v672
      %v805 = vmul.f32 %v673, %v673
      %v806 = vmul.f32 %v678, %v678
      %v807 = vrot.slane %v804, 7
      %v808 = vrot.slane %v805, 7
      %v809 = vsel %vm404, %v807, %v808
      %v810 = vsel %vm404, %v808, %v807
      %v811 = vrot.slane %v804, 1
      %v812 = vrot.slane %v805, 1
      %v813 = vsel %vm409, %v811, %v812
      %v814 = vsel %vm409, %v812, %v811
      %v815 = vlaneseq
      %v816 = vshrl.u32 %v815, 7
      %v817 = vsub.s32 0, %v816
      %v818 = vrot.slane %v806, %v817
      %v819 = vsel %vm390, %v818, %v810
      %v820 = vsel %vm391, %v818, %v809
      %v821 = vlaneseq
      %v822 = vshrl.u32 %v821, 7
      %v823 = vsub.s32 1, %v822
      %v824 = vrot.slane %v806, %v823
      %v825 = vsel %vm392, %v824, %v813
      %v826 = vsel %vm393, %v824, %v814
      %v827 = vadd.f32 %v819, %v804
      %v828 = vadd.f32 %v820, %v805
      %v829 = vadd.f32 %v827, %v825
      %v830 = vadd.f32 %v828, %v826
      %831 = vrot.lane.b32.xlu0 %v829, 1
      %v832 = vpop.permute.xlu0 %831
      %833 = vrot.lane.b32.xlu0 %v830, 1
      %v834 = vpop.permute.xlu0 %833
      %835 = vrot.lane.b32.xlu0 %v829, 127
      %v836 = vpop.permute.xlu0 %835
      %837 = vrot.lane.b32.xlu0 %v830, 127
      %v838 = vpop.permute.xlu0 %837
      %v839 = vsel %vm394, %v836, %v832
      %v840 = vsel %vm394, %v838, %v834
      %v841 = vsel %vm395, %v832, %v836
      %v842 = vsel %vm395, %v834, %v838
      %v843 = vadd.f32 %v839, %v829
      %v844 = vadd.f32 %v840, %v830
      %v845 = vadd.f32 %v843, %v841
      %v846 = vadd.f32 %v844, %v842
      %v847 = vmul.f32 %v675, %v675
      %v848 = vmul.f32 %v676, %v676
      %v849 = vmul.f32 %v680, %v680
      %v850 = vrot.slane %v847, 7
      %v851 = vrot.slane %v848, 7
      %v852 = vsel %vm404, %v850, %v851
      %v853 = vsel %vm404, %v851, %v850
      %v854 = vrot.slane %v847, 1
      %v855 = vrot.slane %v848, 1
      %v856 = vsel %vm409, %v854, %v855
      %v857 = vsel %vm409, %v855, %v854
      %v858 = vlaneseq
      %v859 = vshrl.u32 %v858, 7
      %v860 = vsub.s32 0, %v859
      %v861 = vrot.slane %v849, %v860
      %v862 = vsel %vm390, %v861, %v853
      %v863 = vsel %vm391, %v861, %v852
      %v864 = vlaneseq
      %v865 = vshrl.u32 %v864, 7
      %v866 = vsub.s32 1, %v865
      %v867 = vrot.slane %v849, %v866
      %v868 = vsel %vm392, %v867, %v856
      %v869 = vsel %vm393, %v867, %v857
      %v870 = vadd.f32 %v862, %v847
      %v871 = vadd.f32 %v863, %v848
      %v872 = vadd.f32 %v870, %v868
      %v873 = vadd.f32 %v871, %v869
      %874 = vrot.lane.b32.xlu0 %v872, 1
      %v875 = vpop.permute.xlu0 %874
      %876 = vrot.lane.b32.xlu0 %v873, 1
      %v877 = vpop.permute.xlu0 %876
      %878 = vrot.lane.b32.xlu0 %v872, 127
      %v879 = vpop.permute.xlu0 %878
      %880 = vrot.lane.b32.xlu0 %v873, 127
      %v881 = vpop.permute.xlu0 %880
      %v882 = vsel %vm394, %v879, %v875
      %v883 = vsel %vm394, %v881, %v877
      %v884 = vsel %vm395, %v875, %v879
      %v885 = vsel %vm395, %v877, %v881
      %v886 = vadd.f32 %v882, %v872
      %v887 = vadd.f32 %v883, %v873
      %v888 = vadd.f32 %v886, %v884
      %v889 = vadd.f32 %v887, %v885
      %v890 = vmul.f32 %v719, %v719
      %v891 = vmul.f32 %v720, %v720
      %v892 = vmul.f32 %v759, %v759
      %v893 = vmul.f32 %v760, %v760
      %v894 = vmul.f32 %v719, %v759
      %v895 = vmul.f32 %v720, %v760
      %v896 = vmul.f32 %v802, 9.0
      %v897 = vmul.f32 %v803, 9.0
      %v898 = vsub.f32 %v896, %v894
      %v899 = vsub.f32 %v897, %v895
      %v900 = vmul.f32 %v845, 9.0
      %v901 = vmul.f32 %v846, 9.0
      %v902 = vsub.f32 %v900, %v890
      %v903 = vsub.f32 %v901, %v891
      %v904 = vmul.f32 %v888, 9.0
      %v905 = vmul.f32 %v889, 9.0
      %v906 = vsub.f32 %v904, %v892
      %v907 = vsub.f32 %v905, %v893
      %v908 = vmul.f32 %v894, 2.0
      %v909 = vmul.f32 %v895, 2.0
      %v910 = vadd.f32 %v908, 0.0081
      %v911 = vadd.f32 %v909, 0.0081
      %v912 = vmul.f32 %v898, 2.0
      %v913 = vmul.f32 %v899, 2.0
      %v914 = vadd.f32 %v912, 0.0729
      %v915 = vadd.f32 %v913, 0.0729
      %v916 = vmul.f32 %v910, %v914
      %v917 = vmul.f32 %v911, %v915
      %v918 = vadd.f32 %v890, %v892
      %v919 = vadd.f32 %v891, %v893
      %v920 = vadd.f32 %v918, 0.0081
      %v921 = vadd.f32 %v919, 0.0081
      %v922 = vadd.f32 %v902, %v906
      %v923 = vadd.f32 %v903, %v907
      %v924 = vadd.f32 %v922, 0.0729
      %v925 = vadd.f32 %v923, 0.0729
      %v926 = vmul.f32 %v920, %v924
      %v927 = vmul.f32 %v921, %v925
      %v928 = vrcp.pop %v926
      %v929 = vrcp.pop %v927
      %v930 = vmul.f32 %v916, %v928
      %v931 = vmul.f32 %v917, %v929
      %v932 = vsub.f32 1.0, %v930
      %v933 = vsub.f32 1.0, %v931
      %v934 = vmul.f32 %v932, 0.5
      %v935 = vmul.f32 %v933, 0.5
      %v936 = vmax.f32 %v934, 0.0
      %v937 = vmax.f32 %v935, 0.0
      %v938 = vmin.f32 %v936, 1.0
      %v939 = vmin.f32 %v937, 1.0
      %v940 = vadd.f32 %v663, %v938
      %v941 = vadd.f32 %v664, %v939
      %v942 = vsub.f32 %v672, %v675
      %v943 = vsub.f32 %v673, %v676
      %v944 = vand.u32 2147483647, %v942
      %v945 = vand.u32 2147483647, %v943
      %v946 = vadd.f32 %v669, %v944
      %v947 = vadd.f32 %v670, %v945
      %s948 = scalar_lea.vmem %s339, 32
      %v949 = vld [vmem:[%s948] sm:$0xff]
      %v950 = vld [vmem:[%s948 + $0x8] sm:$0xff]
      %s951 = scalar_lea.vmem %s349, 32
      %v952 = vld [vmem:[%s951] sm:$0xff]
      %v953 = vld [vmem:[%s951 + $0x8] sm:$0xff]
      %s954 = scalar_lea.vmem %s359, 4
      %v955 = vld [vmem:[%s954] sm:$0x3]
      %s956 = scalar_lea.vmem %s368, 4
      %v957 = vld [vmem:[%s956] sm:$0x3]
      %v958 = vrot.slane %v949, 7
      %v959 = vrot.slane %v950, 7
      %v960 = vsel %vm404, %v958, %v959
      %v961 = vsel %vm404, %v959, %v958
      %v962 = vrot.slane %v949, 1
      %v963 = vrot.slane %v950, 1
      %v964 = vsel %vm409, %v962, %v963
      %v965 = vsel %vm409, %v963, %v962
      %v966 = vlaneseq
      %v967 = vshrl.u32 %v966, 7
      %v968 = vsub.s32 0, %v967
      %v969 = vrot.slane %v955, %v968
      %v970 = vsel %vm390, %v969, %v961
      %v971 = vsel %vm391, %v969, %v960
      %v972 = vlaneseq
      %v973 = vshrl.u32 %v972, 7
      %v974 = vsub.s32 1, %v973
      %v975 = vrot.slane %v955, %v974
      %v976 = vsel %vm392, %v975, %v964
      %v977 = vsel %vm393, %v975, %v965
      %v978 = vadd.f32 %v970, %v949
      %v979 = vadd.f32 %v971, %v950
      %v980 = vadd.f32 %v978, %v976
      %v981 = vadd.f32 %v979, %v977
      %982 = vrot.lane.b32.xlu0 %v980, 1
      %v983 = vpop.permute.xlu0 %982
      %984 = vrot.lane.b32.xlu0 %v981, 1
      %v985 = vpop.permute.xlu0 %984
      %986 = vrot.lane.b32.xlu0 %v980, 127
      %v987 = vpop.permute.xlu0 %986
      %988 = vrot.lane.b32.xlu0 %v981, 127
      %v989 = vpop.permute.xlu0 %988
      %v990 = vsel %vm394, %v987, %v983
      %v991 = vsel %vm394, %v989, %v985
      %v992 = vsel %vm395, %v983, %v987
      %v993 = vsel %vm395, %v985, %v989
      %v994 = vadd.f32 %v990, %v980
      %v995 = vadd.f32 %v991, %v981
      %v996 = vadd.f32 %v994, %v992
      %v997 = vadd.f32 %v995, %v993
      %v998 = vrot.slane %v952, 7
      %v999 = vrot.slane %v953, 7
      %v1000 = vsel %vm404, %v998, %v999
      %v1001 = vsel %vm404, %v999, %v998
      %v1002 = vrot.slane %v952, 1
      %v1003 = vrot.slane %v953, 1
      %v1004 = vsel %vm409, %v1002, %v1003
      %v1005 = vsel %vm409, %v1003, %v1002
      %v1006 = vlaneseq
      %v1007 = vshrl.u32 %v1006, 7
      %v1008 = vsub.s32 0, %v1007
      %v1009 = vrot.slane %v957, %v1008
      %v1010 = vsel %vm390, %v1009, %v1001
      %v1011 = vsel %vm391, %v1009, %v1000
      %v1012 = vlaneseq
      %v1013 = vshrl.u32 %v1012, 7
      %v1014 = vsub.s32 1, %v1013
      %v1015 = vrot.slane %v957, %v1014
      %v1016 = vsel %vm392, %v1015, %v1004
      %v1017 = vsel %vm393, %v1015, %v1005
      %v1018 = vadd.f32 %v1010, %v952
      %v1019 = vadd.f32 %v1011, %v953
      %v1020 = vadd.f32 %v1018, %v1016
      %v1021 = vadd.f32 %v1019, %v1017
      %1022 = vrot.lane.b32.xlu0 %v1020, 1
      %v1023 = vpop.permute.xlu0 %1022
      %1024 = vrot.lane.b32.xlu0 %v1021, 1
      %v1025 = vpop.permute.xlu0 %1024
      %1026 = vrot.lane.b32.xlu0 %v1020, 127
      %v1027 = vpop.permute.xlu0 %1026
      %1028 = vrot.lane.b32.xlu0 %v1021, 127
      %v1029 = vpop.permute.xlu0 %1028
      %v1030 = vsel %vm394, %v1027, %v1023
      %v1031 = vsel %vm394, %v1029, %v1025
      %v1032 = vsel %vm395, %v1023, %v1027
      %v1033 = vsel %vm395, %v1025, %v1029
      %v1034 = vadd.f32 %v1030, %v1020
      %v1035 = vadd.f32 %v1031, %v1021
      %v1036 = vadd.f32 %v1034, %v1032
      %v1037 = vadd.f32 %v1035, %v1033
      %v1038 = vmul.f32 %v949, %v952
      %v1039 = vmul.f32 %v950, %v953
      %v1040 = vmul.f32 %v955, %v957
      %v1041 = vrot.slane %v1038, 7
      %v1042 = vrot.slane %v1039, 7
      %v1043 = vsel %vm404, %v1041, %v1042
      %v1044 = vsel %vm404, %v1042, %v1041
      %v1045 = vrot.slane %v1038, 1
      %v1046 = vrot.slane %v1039, 1
      %v1047 = vsel %vm409, %v1045, %v1046
      %v1048 = vsel %vm409, %v1046, %v1045
      %v1049 = vlaneseq
      %v1050 = vshrl.u32 %v1049, 7
      %v1051 = vsub.s32 0, %v1050
      %v1052 = vrot.slane %v1040, %v1051
      %v1053 = vsel %vm390, %v1052, %v1044
      %v1054 = vsel %vm391, %v1052, %v1043
      %v1055 = vlaneseq
      %v1056 = vshrl.u32 %v1055, 7
      %v1057 = vsub.s32 1, %v1056
      %v1058 = vrot.slane %v1040, %v1057
      %v1059 = vsel %vm392, %v1058, %v1047
      %v1060 = vsel %vm393, %v1058, %v1048
      %v1061 = vadd.f32 %v1053, %v1038
      %v1062 = vadd.f32 %v1054, %v1039
      %v1063 = vadd.f32 %v1061, %v1059
      %v1064 = vadd.f32 %v1062, %v1060
      %1065 = vrot.lane.b32.xlu0 %v1063, 1
      %v1066 = vpop.permute.xlu0 %1065
      %1067 = vrot.lane.b32.xlu0 %v1064, 1
      %v1068 = vpop.permute.xlu0 %1067
      %1069 = vrot.lane.b32.xlu0 %v1063, 127
      %v1070 = vpop.permute.xlu0 %1069
      %1071 = vrot.lane.b32.xlu0 %v1064, 127
      %v1072 = vpop.permute.xlu0 %1071
      %v1073 = vsel %vm394, %v1070, %v1066
      %v1074 = vsel %vm394, %v1072, %v1068
      %v1075 = vsel %vm395, %v1066, %v1070
      %v1076 = vsel %vm395, %v1068, %v1072
      %v1077 = vadd.f32 %v1073, %v1063
      %v1078 = vadd.f32 %v1074, %v1064
      %v1079 = vadd.f32 %v1077, %v1075
      %v1080 = vadd.f32 %v1078, %v1076
      %v1081 = vmul.f32 %v949, %v949
      %v1082 = vmul.f32 %v950, %v950
      %v1083 = vmul.f32 %v955, %v955
      %v1084 = vrot.slane %v1081, 7
      %v1085 = vrot.slane %v1082, 7
      %v1086 = vsel %vm404, %v1084, %v1085
      %v1087 = vsel %vm404, %v1085, %v1084
      %v1088 = vrot.slane %v1081, 1
      %v1089 = vrot.slane %v1082, 1
      %v1090 = vsel %vm409, %v1088, %v1089
      %v1091 = vsel %vm409, %v1089, %v1088
      %v1092 = vlaneseq
      %v1093 = vshrl.u32 %v1092, 7
      %v1094 = vsub.s32 0, %v1093
      %v1095 = vrot.slane %v1083, %v1094
      %v1096 = vsel %vm390, %v1095, %v1087
      %v1097 = vsel %vm391, %v1095, %v1086
      %v1098 = vlaneseq
      %v1099 = vshrl.u32 %v1098, 7
      %v1100 = vsub.s32 1, %v1099
      %v1101 = vrot.slane %v1083, %v1100
      %v1102 = vsel %vm392, %v1101, %v1090
      %v1103 = vsel %vm393, %v1101, %v1091
      %v1104 = vadd.f32 %v1096, %v1081
      %v1105 = vadd.f32 %v1097, %v1082
      %v1106 = vadd.f32 %v1104, %v1102
      %v1107 = vadd.f32 %v1105, %v1103
      %1108 = vrot.lane.b32.xlu0 %v1106, 1
      %v1109 = vpop.permute.xlu0 %1108
      %1110 = vrot.lane.b32.xlu0 %v1107, 1
      %v1111 = vpop.permute.xlu0 %1110
      %1112 = vrot.lane.b32.xlu0 %v1106, 127
      %v1113 = vpop.permute.xlu0 %1112
      %1114 = vrot.lane.b32.xlu0 %v1107, 127
      %v1115 = vpop.permute.xlu0 %1114
      %v1116 = vsel %vm394, %v1113, %v1109
      %v1117 = vsel %vm394, %v1115, %v1111
      %v1118 = vsel %vm395, %v1109, %v1113
      %v1119 = vsel %vm395, %v1111, %v1115
      %v1120 = vadd.f32 %v1116, %v1106
      %v1121 = vadd.f32 %v1117, %v1107
      %v1122 = vadd.f32 %v1120, %v1118
      %v1123 = vadd.f32 %v1121, %v1119
      %v1124 = vmul.f32 %v952, %v952
      %v1125 = vmul.f32 %v953, %v953
      %v1126 = vmul.f32 %v957, %v957
      %v1127 = vrot.slane %v1124, 7
      %v1128 = vrot.slane %v1125, 7
      %v1129 = vsel %vm404, %v1127, %v1128
      %v1130 = vsel %vm404, %v1128, %v1127
      %v1131 = vrot.slane %v1124, 1
      %v1132 = vrot.slane %v1125, 1
      %v1133 = vsel %vm409, %v1131, %v1132
      %v1134 = vsel %vm409, %v1132, %v1131
      %v1135 = vlaneseq
      %v1136 = vshrl.u32 %v1135, 7
      %v1137 = vsub.s32 0, %v1136
      %v1138 = vrot.slane %v1126, %v1137
      %v1139 = vsel %vm390, %v1138, %v1130
      %v1140 = vsel %vm391, %v1138, %v1129
      %v1141 = vlaneseq
      %v1142 = vshrl.u32 %v1141, 7
      %v1143 = vsub.s32 1, %v1142
      %v1144 = vrot.slane %v1126, %v1143
      %v1145 = vsel %vm392, %v1144, %v1133
      %v1146 = vsel %vm393, %v1144, %v1134
      %v1147 = vadd.f32 %v1139, %v1124
      %v1148 = vadd.f32 %v1140, %v1125
      %v1149 = vadd.f32 %v1147, %v1145
      %v1150 = vadd.f32 %v1148, %v1146
      %1151 = vrot.lane.b32.xlu0 %v1149, 1
      %v1152 = vpop.permute.xlu0 %1151
      %1153 = vrot.lane.b32.xlu0 %v1150, 1
      %v1154 = vpop.permute.xlu0 %1153
      %1155 = vrot.lane.b32.xlu0 %v1149, 127
      %v1156 = vpop.permute.xlu0 %1155
      %1157 = vrot.lane.b32.xlu0 %v1150, 127
      %v1158 = vpop.permute.xlu0 %1157
      %v1159 = vsel %vm394, %v1156, %v1152
      %v1160 = vsel %vm394, %v1158, %v1154
      %v1161 = vsel %vm395, %v1152, %v1156
      %v1162 = vsel %vm395, %v1154, %v1158
      %v1163 = vadd.f32 %v1159, %v1149
      %v1164 = vadd.f32 %v1160, %v1150
      %v1165 = vadd.f32 %v1163, %v1161
      %v1166 = vadd.f32 %v1164, %v1162
      %v1167 = vmul.f32 %v996, %v996
      %v1168 = vmul.f32 %v997, %v997
      %v1169 = vmul.f32 %v1036, %v1036
      %v1170 = vmul.f32 %v1037, %v1037
      %v1171 = vmul.f32 %v996, %v1036
      %v1172 = vmul.f32 %v997, %v1037
      %v1173 = vmul.f32 %v1079, 9.0
      %v1174 = vmul.f32 %v1080, 9.0
      %v1175 = vsub.f32 %v1173, %v1171
      %v1176 = vsub.f32 %v1174, %v1172
      %v1177 = vmul.f32 %v1122, 9.0
      %v1178 = vmul.f32 %v1123, 9.0
      %v1179 = vsub.f32 %v1177, %v1167
      %v1180 = vsub.f32 %v1178, %v1168
      %v1181 = vmul.f32 %v1165, 9.0
      %v1182 = vmul.f32 %v1166, 9.0
      %v1183 = vsub.f32 %v1181, %v1169
      %v1184 = vsub.f32 %v1182, %v1170
      %v1185 = vmul.f32 %v1171, 2.0
      %v1186 = vmul.f32 %v1172, 2.0
      %v1187 = vadd.f32 %v1185, 0.0081
      %v1188 = vadd.f32 %v1186, 0.0081
      %v1189 = vmul.f32 %v1175, 2.0
      %v1190 = vmul.f32 %v1176, 2.0
      %v1191 = vadd.f32 %v1189, 0.0729
      %v1192 = vadd.f32 %v1190, 0.0729
      %v1193 = vmul.f32 %v1187, %v1191
      %v1194 = vmul.f32 %v1188, %v1192
      %v1195 = vadd.f32 %v1167, %v1169
      %v1196 = vadd.f32 %v1168, %v1170
      %v1197 = vadd.f32 %v1195, 0.0081
      %v1198 = vadd.f32 %v1196, 0.0081
      %v1199 = vadd.f32 %v1179, %v1183
      %v1200 = vadd.f32 %v1180, %v1184
      %v1201 = vadd.f32 %v1199, 0.0729
      %v1202 = vadd.f32 %v1200, 0.0729
      %v1203 = vmul.f32 %v1197, %v1201
      %v1204 = vmul.f32 %v1198, %v1202
      %v1205 = vrcp.pop %v1203
      %v1206 = vrcp.pop %v1204
      %v1207 = vmul.f32 %v1193, %v1205
      %v1208 = vmul.f32 %v1194, %v1206
      %v1209 = vsub.f32 1.0, %v1207
      %v1210 = vsub.f32 1.0, %v1208
      %v1211 = vmul.f32 %v1209, 0.5
      %v1212 = vmul.f32 %v1210, 0.5
      %v1213 = vmax.f32 %v1211, 0.0
      %v1214 = vmax.f32 %v1212, 0.0
      %v1215 = vmin.f32 %v1213, 1.0
      %v1216 = vmin.f32 %v1214, 1.0
      %v1217 = vadd.f32 %v940, %v1215
      %v1218 = vadd.f32 %v941, %v1216
      %v1219 = vsub.f32 %v949, %v952
      %v1220 = vsub.f32 %v950, %v953
      %v1221 = vand.u32 2147483647, %v1219
      %v1222 = vand.u32 2147483647, %v1220
      %v1223 = vadd.f32 %v946, %v1221
      %v1224 = vadd.f32 %v947, %v1222
      %v1225 = vmul.f32 %v1217, 0.28333333
      %v1226 = vmul.f32 %v1218, 0.28333333
      %v1227 = vmul.f32 %v1223, 0.05
      %v1228 = vmul.f32 %v1224, 0.05
      %v1229 = vadd.f32 %v1225, %v1227
      %v1230 = vadd.f32 %v1226, %v1228
      %1231 = vst [vmem:[%s377] sm:$0xff] %v1229
      %1232 = vst [vmem:[%s377 + $0x8] sm:$0xff] %v1230
      %vm1233 = vcmp.lt.s32.totalorder %v389, 16
      %v1234 = vsel %vm1233, %v1229, 0.0
      %v1235 = vsel %vm1233, %v1230, 0.0
      %v1236 = vadd.f32 %v1234, %v1235
      %1237 = vadd.xlane.f32.xlu0 %v1236
      %v1238 = vpop.xlane.xlu0 %1237
      %v1239 = vrot.slane %v1238, 4
      %v1240 = vadd.f32 %v1238, %v1239
      %v1241 = vrot.slane %v1240, 2
      %v1242 = vadd.f32 %v1240, %v1241
      %v1243 = vrot.slane %v1242, 1
      %v1244 = vadd.f32 %v1242, %v1243
      %s1245 = vtos %v1244
      %v1246 = vmul.f32 %v1234, %v1234
      %v1247 = vmul.f32 %v1235, %v1235
      %v1248 = vadd.f32 %v1246, %v1247
      %1249 = vadd.xlane.f32.xlu0 %v1248
      %v1250 = vpop.xlane.xlu0 %1249
      %v1251 = vrot.slane %v1250, 4
      %v1252 = vadd.f32 %v1250, %v1251
      %v1253 = vrot.slane %v1252, 2
      %v1254 = vadd.f32 %v1252, %v1253
      %v1255 = vrot.slane %v1254, 1
      %v1256 = vadd.f32 %v1254, %v1255
      %s1257 = vtos %v1256
      %vm1258 = vcmp.eq.s32.totalorder %v389, 1
      %v1259 = vstv %s1257
      %v1260 = vsel %vm1258, %v1259, 0.0
      %v1261 = vstv %s1245
      %v1262 = vsel %vm394, %v1261, %v1260
      %1263 = vst [vmem:[%s384] sm:$0x1] %v1262
      %s1264 = smul.u32 2, %s22
      %p1265 = scmp.lt.s32.totalorder %s21, 1
      %s1266 = scalar_select %p1265, %s21, 1
      %p1267 = scmp.lt.s32.totalorder %s1264, 1
      %s1268 = scalar_select %p1267, %s1264, 1
      %s1269 = smul.addr %s1266, 2
      %s1270 = sadd.s32 %s1268, %s1269
      %s1271 = smul.addr %s1270, 8
      %s1272 = scalar_lea.vmem %s4, %s1271
      %p1273 = scmp.lt.s32.totalorder %s21, 1
      %s1274 = scalar_select %p1273, %s21, 1
      %p1275 = scmp.lt.s32.totalorder %s22, 0
      %s1276 = scalar_select %p1275, %s22, 0
      %s1277 = sadd.s32 %s1276, %s1274
      %s1278 = scalar_lea.vmem %s5, %s1277
      // Predicated region
      $region37: #{photometric_loss.1} parent=35 // pred_check
        %p1279 = pneg %p161
      $region38: #{photometric_loss.1} parent=35 // pred_check_branch
        %1281 = sbr.rel (%p1279) target = $region40
      $region39: #{photometric_loss.1} parent=35 // pred_region
        %s1282 = smul.u32 2, %s22
      $region40: #{photometric_loss.1} parent=35 // pred_fallthru
        _
      // Predicated region
      $region41: #{photometric_loss.1} parent=35 // pred_check
        %p1283 = pneg %p189
      $region42: #{photometric_loss.1} parent=35 // pred_check_branch
        %1285 = sbr.rel (%p1283) target = $region44
      $region43: #{photometric_loss.1} parent=35 // pred_region
        _
      $region44: #{photometric_loss.1} parent=35 // pred_fallthru
        _
    $region36: #{photometric_loss.1} parent=5 // pred_fallthru
      _
    %p1286 = scmp.le.s32.totalorder 2, %s12
    // Predicated region
    $region45: #{photometric_loss.1} parent=5 // pred_check
      %p1287 = pneg %p1286
    $region46: #{photometric_loss.1} parent=5 // pred_check_branch
      %1289 = sbr.rel (%p1287) target = $region48
    $region47: #{photometric_loss.1} parent=5 // pred_region
      %s1290 = ssub.s32 %s12, 2
      // Predicated region
      $region49: #{photometric_loss.1} parent=47 // pred_check
        %p1291 = pneg %p167
      $region50: #{photometric_loss.1} parent=47 // pred_check_branch
        %1293 = sbr.rel (%p1291) target = $region52
      $region51: #{photometric_loss.1} parent=47 // pred_region
        %s1294 = smul.u32 2, %s24
        %p1295 = scmp.lt.s32.totalorder %s23, 1
        %s1296 = scalar_select %p1295, %s23, 1
        %p1297 = scmp.lt.s32.totalorder %s1294, 1
        %s1298 = scalar_select %p1297, %s1294, 1
        %s1299 = smul.addr %s1296, 2
        %s1300 = sadd.s32 %s1298, %s1299
        %s1301 = smul.addr %s1300, 8
        %s1302 = scalar_lea.vmem %s4, %s1301
      $region52: #{photometric_loss.1} parent=47 // pred_fallthru
        _
      // Predicated region
      $region53: #{photometric_loss.1} parent=47 // pred_check
        %p1303 = pneg %p195
      $region54: #{photometric_loss.1} parent=47 // pred_check_branch
        %1305 = sbr.rel (%p1303) target = $region56
      $region55: #{photometric_loss.1} parent=47 // pred_region
        %p1306 = scmp.lt.s32.totalorder %s23, 1
        %s1307 = scalar_select %p1306, %s23, 1
        %p1308 = scmp.lt.s32.totalorder %s24, 0
        %s1309 = scalar_select %p1308, %s24, 0
        %s1310 = sadd.s32 %s1309, %s1307
        %s1311 = scalar_lea.vmem %s5, %s1310
      $region56: #{photometric_loss.1} parent=47 // pred_fallthru
        _
    $region48: #{photometric_loss.1} parent=5 // pred_fallthru
      _
  $region6: #{photometric_loss.1} parent=0 // loop_footer
    %s16 = sadd.s32 1, %s12
  $region7: #{photometric_loss.1} parent=0 // loop_footer_branch
    %11 = sbr.rel target = $region3
  $region8: #{photometric_loss.1} parent=0 // loop_exit
    _

</llo_original>
